<compile_context>
chip_gen: v5e
topology: v5e:2x2
jax: 0.10.0
libtpu: 0.0.40
codegen_flags: <defaults>
</compile_context>

<pallas_src>
import functools

import jax
import jax.numpy as jnp
from jax.experimental import pallas as pl
from jax.experimental.pallas import tpu as pltpu


def _round_up(x, m):
    return (x + m - 1) // m * m


# ---------------- Pallas kernels ----------------

def _conv_bias_stats_kernel(a_ref, w_ref, b_ref, y_ref, stats_ref, *, m_real):
    """One M-tile of the im2col matmul with fused bias + BN-stat partial sums.

    a: (tm, K) bf16 patches, w: (K, C_p) bf16, b: (1, C_p) f32.
    Outputs: y tile (tm, C_p) f32 and per-tile stats (1, 8, C_p) f32
    (sublane 0 = sum over valid rows, sublane 1 = sum of squares, rest zero).
    """
    i = pl.program_id(0)
    tm = a_ref.shape[0]

    acc = jnp.dot(a_ref[...], w_ref[...], preferred_element_type=jnp.float32)
    y = acc + b_ref[...]                      # bias fused into the matmul epilogue
    y_ref[...] = y

    # Mask out rows that are padding of the M axis (keeps BN stats exact).
    rows = jax.lax.broadcasted_iota(jnp.int32, (tm, 1), 0) + i * tm
    mask = (rows < m_real).astype(jnp.float32)          # (tm, 1)
    ym = y * mask

    s = jnp.sum(ym, axis=0, keepdims=True)               # (1, C_p)  sum
    sq = jnp.sum(ym * y, axis=0, keepdims=True)          # (1, C_p)  sum of squares
    zeros = jnp.zeros((6, s.shape[1]), jnp.float32)
    stats_ref[...] = jnp.concatenate([s, sq, zeros], axis=0)[None]


def _bn_relu_kernel(x_ref, scale_ref, shift_ref, o_ref):
    # relu(x * scale + shift), per-channel scale/shift broadcast across rows.
    o_ref[...] = jnp.maximum(x_ref[...] * scale_ref[...] + shift_ref[...], 0.0)


def conv_bias_stats(a, w, b, *, m_real, tm):
    m_pad, k = a.shape
    _, c_p = w.shape
    grid_m = m_pad // tm
    kernel = functools.partial(_conv_bias_stats_kernel, m_real=m_real)
    return pl.pallas_call(
        kernel,
        out_shape=(
            jax.ShapeDtypeStruct((m_pad, c_p), jnp.float32),
            jax.ShapeDtypeStruct((grid_m, 8, c_p), jnp.float32),
        ),
        grid=(grid_m,),
        in_specs=[
            pl.BlockSpec((tm, k), lambda i: (i, 0)),      # patch tile
            pl.BlockSpec((k, c_p), lambda i: (0, 0)),     # weights (resident)
            pl.BlockSpec((1, c_p), lambda i: (0, 0)),     # bias (resident)
        ],
        out_specs=(
            pl.BlockSpec((tm, c_p), lambda i: (i, 0)),
            pl.BlockSpec((1, 8, c_p), lambda i: (i, 0, 0)),
        ),
        compiler_params=pltpu.CompilerParams(
            dimension_semantics=("parallel",),
            vmem_limit_bytes=32 * 1024 * 1024,
        ),
    )(a, w, b)


def bn_relu(x, scale, shift, *, tm):
    m_pad, c_p = x.shape
    return pl.pallas_call(
        _bn_relu_kernel,
        out_shape=jax.ShapeDtypeStruct((m_pad, c_p), jnp.float32),
        grid=(m_pad // tm,),
        in_specs=[
            pl.BlockSpec((tm, c_p), lambda i: (i, 0)),
            pl.BlockSpec((1, c_p), lambda i: (0, 0)),
            pl.BlockSpec((1, c_p), lambda i: (0, 0)),
        ],
        out_specs=pl.BlockSpec((tm, c_p), lambda i: (i, 0)),
        compiler_params=pltpu.CompilerParams(
            dimension_semantics=("parallel",),
            vmem_limit_bytes=32 * 1024 * 1024,
        ),
    )(x, scale, shift)


# ---------------- JAX glue ----------------

def _im2col_3x3_nhwc(x):
    """(N, H, W, C) -> (N*H*W, C*9) patch matrix, column order (c_in, kh, kw)."""
    n, h, w, c = x.shape
    xp = jnp.pad(x, ((0, 0), (1, 1), (1, 1), (0, 0)))
    taps = [xp[:, kh:kh + h, kw:kw + w, :] for kh in range(3) for kw in range(3)]
    patches = jnp.stack(taps, axis=-1)            # (N, H, W, C, 9), tap = kh*3+kw
    return patches.reshape(n * h * w, c * 9)      # col = c*9 + kh*3 + kw


def conv_bn_relu(x_nhwc, weight, bias, gamma, beta, eps=1e-5, tm=256):
    """3x3 same conv + BatchNorm(train-mode batch stats) + ReLU, NHWC in / NHWC out."""
    n, h, w, c_in = x_nhwc.shape
    c_out = weight.shape[0]
    c_out_p = _round_up(c_out, 128)               # lane-dense output channels
    m = n * h * w
    tm = min(tm, _round_up(m, 8))
    m_pad = _round_up(m, tm)

    # TODO(synk): fuse the 3x3 patch extraction into the conv kernel (halo-row DMA
    # from the NHWC HBM ref) to avoid materializing the 9x im2col matrix in HBM.
    a = _im2col_3x3_nhwc(x_nhwc).astype(jnp.bfloat16)         # (M, C_in*9)
    a = jnp.pad(a, ((0, m_pad - m), (0, 0)))

    w2 = weight.reshape(c_out, c_in * 9).T                    # (K, C_out), PyTorch layout
    w2 = jnp.pad(w2, ((0, 0), (0, c_out_p - c_out))).astype(jnp.bfloat16)
    b2 = jnp.pad(bias, (0, c_out_p - c_out)).reshape(1, c_out_p).astype(jnp.float32)

    y, stats = conv_bias_stats(a, w2, b2, m_real=m, tm=tm)    # (M_pad, C_p), (T, 8, C_p)

    # Tiny per-channel reduction of the per-tile partial sums (biased batch stats,
    # matching PyTorch BatchNorm2d training-mode forward).
    s = jnp.sum(stats[:, 0, :], axis=0)
    sq = jnp.sum(stats[:, 1, :], axis=0)
    mean = s / m
    var = jnp.maximum(sq / m - mean * mean, 0.0)
    gamma_p = jnp.pad(gamma, (0, c_out_p - c_out))
    beta_p = jnp.pad(beta, (0, c_out_p - c_out))
    scale = gamma_p / jnp.sqrt(var + eps)
    shift = beta_p - mean * scale

    z = bn_relu(y, scale.reshape(1, c_out_p), shift.reshape(1, c_out_p), tm=tm)
    return z[:m, :c_out].reshape(n, h, w, c_out)              # stay NHWC between stages


def double_conv(x_nchw, params):
    x = jnp.transpose(x_nchw, (0, 2, 3, 1))       # NCHW -> NHWC once
    y = conv_bn_relu(x, params["w1"], params["b1"], params["g1"], params["be1"])
    y = conv_bn_relu(y, params["w2"], params["b2"], params["g2"], params["be2"])
    return jnp.transpose(y, (0, 3, 1, 2))          # NHWC -> NCHW once


def init_params(key, in_channels, out_channels, mid_channels=None):
    if mid_channels is None:
        mid_channels = out_channels
    k1, k2, k3, k4 = jax.random.split(key, 4)

    def conv_init(kw, kb, c_out, c_in):
        fan_in = c_in * 9
        bound = 1.0 / jnp.sqrt(jnp.float32(fan_in))
        w = jax.random.uniform(kw, (c_out, c_in, 3, 3), jnp.float32, -bound, bound)
        b = jax.random.uniform(kb, (c_out,), jnp.float32, -bound, bound)
        return w, b

    w1, b1 = conv_init(k1, k2, mid_channels, in_channels)
    w2, b2 = conv_init(k3, k4, out_channels, mid_channels)
    return dict(
        w1=w1, b1=b1,
        g1=jnp.ones((mid_channels,), jnp.float32),
        be1=jnp.zeros((mid_channels,), jnp.float32),
        w2=w2, b2=b2,
        g2=jnp.ones((out_channels,), jnp.float32),
        be2=jnp.zeros((out_channels,), jnp.float32),
    )


if __name__ == "__main__":
    key = jax.random.PRNGKey(0)
    kx, kp = jax.random.split(key)

    N, C_in, H, W = 2, 4, 16, 16
    C_out = 8
    x = jax.random.normal(kx, (N, C_in, H, W), jnp.float32)
    params = init_params(kp, C_in, C_out)

    out = jax.jit(double_conv)(x, params)
    out = jax.block_until_ready(out)
    assert out.shape == (N, C_out, H, W)
    assert out.dtype == jnp.float32
    assert bool(jnp.all(out >= 0.0))  # ReLU output
    print("KERNEL_OK")
</pallas_src>

<mosaic_0001>
module attributes {stable_mosaic.version = 11 : i64} {
  func.func @_conv_bias_stats_kernel(%arg0: i32, %arg1: memref<256x36xbf16, #tpu.memory_space<vmem>>, %arg2: memref<36x128xbf16, #tpu.memory_space<vmem>>, %arg3: memref<1x128xf32, #tpu.memory_space<vmem>>, %arg4: memref<256x128xf32, #tpu.memory_space<vmem>>, %arg5: memref<1x8x128xf32, #tpu.memory_space<vmem>>) attributes {dimension_semantics = [#tpu.dimension_semantics<parallel>], iteration_bounds = array<i64: 2>, scalar_prefetch = 0 : i64, scratch_operands = 0 : i64, tpu.core_type = #tpu.core_type<tc>, window_params = [{transform_indices = @transform_0, window_bounds = array<i64: 256, 36>}, {pipeline_mode = #tpu.pipeline_mode<synchronous>, transform_indices = @transform_1, window_bounds = array<i64: 36, 128>}, {pipeline_mode = #tpu.pipeline_mode<synchronous>, transform_indices = @transform_2, window_bounds = array<i64: 1, 128>}, {transform_indices = @transform_3, window_bounds = array<i64: 256, 128>}, {transform_indices = @transform_4, window_bounds = array<i64: 1, 8, 128>}]} {
    %c0 = arith.constant 0 : index
    %c0_0 = arith.constant 0 : index
    %0 = vector.load %arg1[%c0, %c0_0] : memref<256x36xbf16, #tpu.memory_space<vmem>>, vector<256x36xbf16>
    %c0_1 = arith.constant 0 : index
    %c0_2 = arith.constant 0 : index
    %1 = vector.load %arg2[%c0_1, %c0_2] : memref<36x128xbf16, #tpu.memory_space<vmem>>, vector<36x128xbf16>
    %cst = arith.constant dense<0.000000e+00> : vector<256x128xf32>
    %2 = tpu.matmul %0, %1, %cst {dimension_numbers = #tpu.dot_dimension_numbers<[1], [0], [0], [1], [0, 0, 1, 1], [], []>} : vector<256x36xbf16>, vector<36x128xbf16>, vector<256x128xf32> -> vector<256x128xf32>
    %c0_3 = arith.constant 0 : index
    %c0_4 = arith.constant 0 : index
    %3 = vector.load %arg3[%c0_3, %c0_4] : memref<1x128xf32, #tpu.memory_space<vmem>>, vector<1x128xf32>
    %4 = vector.broadcast %3 : vector<1x128xf32> to vector<256x128xf32>
    %5 = arith.addf %2, %4 : vector<256x128xf32>
    %c0_5 = arith.constant 0 : index
    %c0_6 = arith.constant 0 : index
    %6 = vector.load %arg4[%c0_5, %c0_6] : memref<256x128xf32, #tpu.memory_space<vmem>>, vector<256x128xf32>
    tpu.vector_store %arg4[%c0_5, %c0_6], %5 {strides = array<i32>} : memref<256x128xf32, #tpu.memory_space<vmem>>, vector<256x128xf32>,
    %7 = tpu.iota {dimensions = array<i32: 0>} : vector<256x1xi32>
    %c256_i32 = arith.constant 256 : i32
    %8 = arith.muli %arg0, %c256_i32 : i32
    %9 = vector.broadcast %8 : i32 to vector<256x1xi32>
    %10 = arith.addi %7, %9 : vector<256x1xi32>
    %c512_i32 = arith.constant 512 : i32
    %11 = vector.broadcast %c512_i32 : i32 to vector<256x1xi32>
    %12 = arith.cmpi slt, %10, %11 : vector<256x1xi32>
    %13 = arith.extui %12 : vector<256x1xi1> to vector<256x1xi32>
    %14 = arith.sitofp %13 : vector<256x1xi32> to vector<256x1xf32>
    %15 = vector.broadcast %14 : vector<256x1xf32> to vector<256x128xf32>
    %16 = arith.mulf %5, %15 : vector<256x128xf32>
    %cst_7 = arith.constant dense<0.000000e+00> : vector<128xf32>
    %17 = vector.multi_reduction <add>, %16, %cst_7 [0] : vector<256x128xf32> to vector<128xf32>
    %18 = vector.shape_cast %17 : vector<128xf32> to vector<1x128xf32>
    %19 = arith.mulf %16, %5 : vector<256x128xf32>
    %cst_8 = arith.constant dense<0.000000e+00> : vector<128xf32>
    %20 = vector.multi_reduction <add>, %19, %cst_8 [0] : vector<256x128xf32> to vector<128xf32>
    %21 = vector.shape_cast %20 : vector<128xf32> to vector<1x128xf32>
    %cst_9 = arith.constant 0.000000e+00 : f32
    %22 = vector.broadcast %cst_9 : f32 to vector<6x128xf32>
    %23 = tpu.concatenate %18, %21, %22 in 0 : vector<1x128xf32>, vector<1x128xf32>, vector<6x128xf32> -> vector<8x128xf32>
    %24 = vector.shape_cast %23 : vector<8x128xf32> to vector<1x8x128xf32>
    %c0_10 = arith.constant 0 : index
    %c0_11 = arith.constant 0 : index
    %c0_12 = arith.constant 0 : index
    %25 = vector.load %arg5[%c0_10, %c0_11, %c0_12] : memref<1x8x128xf32, #tpu.memory_space<vmem>>, vector<1x8x128xf32>
    tpu.vector_store %arg5[%c0_10, %c0_11, %c0_12], %24 {strides = array<i32>} : memref<1x8x128xf32, #tpu.memory_space<vmem>>, vector<1x8x128xf32>,
    return
  }
  func.func @transform_0(%arg0: i32) -> (i32, i32) {
    %c0_i32 = arith.constant 0 : i32
    %c0_i32_0 = arith.constant 0 : i32
    return %arg0, %c0_i32 : i32, i32
  }
  func.func @transform_1(%arg0: i32) -> (i32, i32) {
    %c0_i32 = arith.constant 0 : i32
    %c0_i32_0 = arith.constant 0 : i32
    %c0_i32_1 = arith.constant 0 : i32
    return %c0_i32, %c0_i32_0 : i32, i32
  }
  func.func @transform_2(%arg0: i32) -> (i32, i32) {
    %c0_i32 = arith.constant 0 : i32
    %c0_i32_0 = arith.constant 0 : i32
    %c0_i32_1 = arith.constant 0 : i32
    return %c0_i32, %c0_i32_0 : i32, i32
  }
  func.func @transform_3(%arg0: i32) -> (i32, i32) {
    %c0_i32 = arith.constant 0 : i32
    %c0_i32_0 = arith.constant 0 : i32
    return %arg0, %c0_i32 : i32, i32
  }
  func.func @transform_4(%arg0: i32) -> (i32, i32, i32) {
    %c0_i32 = arith.constant 0 : i32
    %c0_i32_0 = arith.constant 0 : i32
    %c0_i32_1 = arith.constant 0 : i32
    return %arg0, %c0_i32, %c0_i32_0 : i32, i32, i32
  }
}

module attributes {stable_mosaic.version = 11 : i64} {
  func.func @_bn_relu_kernel(%arg0: i32, %arg1: memref<256x128xf32, #tpu.memory_space<vmem>>, %arg2: memref<1x128xf32, #tpu.memory_space<vmem>>, %arg3: memref<1x128xf32, #tpu.memory_space<vmem>>, %arg4: memref<256x128xf32, #tpu.memory_space<vmem>>) attributes {dimension_semantics = [#tpu.dimension_semantics<parallel>], iteration_bounds = array<i64: 2>, scalar_prefetch = 0 : i64, scratch_operands = 0 : i64, tpu.core_type = #tpu.core_type<tc>, window_params = [{transform_indices = @transform_0, window_bounds = array<i64: 256, 128>}, {pipeline_mode = #tpu.pipeline_mode<synchronous>, transform_indices = @transform_1, window_bounds = array<i64: 1, 128>}, {pipeline_mode = #tpu.pipeline_mode<synchronous>, transform_indices = @transform_2, window_bounds = array<i64: 1, 128>}, {transform_indices = @transform_3, window_bounds = array<i64: 256, 128>}]} {
    %c0 = arith.constant 0 : index
    %c0_0 = arith.constant 0 : index
    %0 = vector.load %arg1[%c0, %c0_0] : memref<256x128xf32, #tpu.memory_space<vmem>>, vector<256x128xf32>
    %c0_1 = arith.constant 0 : index
    %c0_2 = arith.constant 0 : index
    %1 = vector.load %arg2[%c0_1, %c0_2] : memref<1x128xf32, #tpu.memory_space<vmem>>, vector<1x128xf32>
    %2 = vector.broadcast %1 : vector<1x128xf32> to vector<256x128xf32>
    %3 = arith.mulf %0, %2 : vector<256x128xf32>
    %c0_3 = arith.constant 0 : index
    %c0_4 = arith.constant 0 : index
    %4 = vector.load %arg3[%c0_3, %c0_4] : memref<1x128xf32, #tpu.memory_space<vmem>>, vector<1x128xf32>
    %5 = vector.broadcast %4 : vector<1x128xf32> to vector<256x128xf32>
    %6 = arith.addf %3, %5 : vector<256x128xf32>
    %cst = arith.constant 0.000000e+00 : f32
    %7 = vector.broadcast %cst : f32 to vector<256x128xf32>
    %8 = arith.maximumf %6, %7 : vector<256x128xf32>
    %c0_5 = arith.constant 0 : index
    %c0_6 = arith.constant 0 : index
    %9 = vector.load %arg4[%c0_5, %c0_6] : memref<256x128xf32, #tpu.memory_space<vmem>>, vector<256x128xf32>
    tpu.vector_store %arg4[%c0_5, %c0_6], %8 {strides = array<i32>} : memref<256x128xf32, #tpu.memory_space<vmem>>, vector<256x128xf32>,
    return
  }
  func.func @transform_0(%arg0: i32) -> (i32, i32) {
    %c0_i32 = arith.constant 0 : i32
    %c0_i32_0 = arith.constant 0 : i32
    return %arg0, %c0_i32 : i32, i32
  }
  func.func @transform_1(%arg0: i32) -> (i32, i32) {
    %c0_i32 = arith.constant 0 : i32
    %c0_i32_0 = arith.constant 0 : i32
    %c0_i32_1 = arith.constant 0 : i32
    return %c0_i32, %c0_i32_0 : i32, i32
  }
  func.func @transform_2(%arg0: i32) -> (i32, i32) {
    %c0_i32 = arith.constant 0 : i32
    %c0_i32_0 = arith.constant 0 : i32
    %c0_i32_1 = arith.constant 0 : i32
    return %c0_i32, %c0_i32_0 : i32, i32
  }
  func.func @transform_3(%arg0: i32) -> (i32, i32) {
    %c0_i32 = arith.constant 0 : i32
    %c0_i32_0 = arith.constant 0 : i32
    return %arg0, %c0_i32 : i32, i32
  }
}

module attributes {stable_mosaic.version = 11 : i64} {
  func.func @_conv_bias_stats_kernel(%arg0: i32, %arg1: memref<256x72xbf16, #tpu.memory_space<vmem>>, %arg2: memref<72x128xbf16, #tpu.memory_space<vmem>>, %arg3: memref<1x128xf32, #tpu.memory_space<vmem>>, %arg4: memref<256x128xf32, #tpu.memory_space<vmem>>, %arg5: memref<1x8x128xf32, #tpu.memory_space<vmem>>) attributes {dimension_semantics = [#tpu.dimension_semantics<parallel>], iteration_bounds = array<i64: 2>, scalar_prefetch = 0 : i64, scratch_operands = 0 : i64, tpu.core_type = #tpu.core_type<tc>, window_params = [{transform_indices = @transform_0, window_bounds = array<i64: 256, 72>}, {pipeline_mode = #tpu.pipeline_mode<synchronous>, transform_indices = @transform_1, window_bounds = array<i64: 72, 128>}, {pipeline_mode = #tpu.pipeline_mode<synchronous>, transform_indices = @transform_2, window_bounds = array<i64: 1, 128>}, {transform_indices = @transform_3, window_bounds = array<i64: 256, 128>}, {transform_indices = @transform_4, window_bounds = array<i64: 1, 8, 128>}]} {
    %c0 = arith.constant 0 : index
    %c0_0 = arith.constant 0 : index
    %0 = vector.load %arg1[%c0, %c0_0] : memref<256x72xbf16, #tpu.memory_space<vmem>>, vector<256x72xbf16>
    %c0_1 = arith.constant 0 : index
    %c0_2 = arith.constant 0 : index
    %1 = vector.load %arg2[%c0_1, %c0_2] : memref<72x128xbf16, #tpu.memory_space<vmem>>, vector<72x128xbf16>
    %cst = arith.constant dense<0.000000e+00> : vector<256x128xf32>
    %2 = tpu.matmul %0, %1, %cst {dimension_numbers = #tpu.dot_dimension_numbers<[1], [0], [0], [1], [0, 0, 1, 1], [], []>} : vector<256x72xbf16>, vector<72x128xbf16>, vector<256x128xf32> -> vector<256x128xf32>
    %c0_3 = arith.constant 0 : index
    %c0_4 = arith.constant 0 : index
    %3 = vector.load %arg3[%c0_3, %c0_4] : memref<1x128xf32, #tpu.memory_space<vmem>>, vector<1x128xf32>
    %4 = vector.broadcast %3 : vector<1x128xf32> to vector<256x128xf32>
    %5 = arith.addf %2, %4 : vector<256x128xf32>
    %c0_5 = arith.constant 0 : index
    %c0_6 = arith.constant 0 : index
    %6 = vector.load %arg4[%c0_5, %c0_6] : memref<256x128xf32, #tpu.memory_space<vmem>>, vector<256x128xf32>
    tpu.vector_store %arg4[%c0_5, %c0_6], %5 {strides = array<i32>} : memref<256x128xf32, #tpu.memory_space<vmem>>, vector<256x128xf32>,
    %7 = tpu.iota {dimensions = array<i32: 0>} : vector<256x1xi32>
    %c256_i32 = arith.constant 256 : i32
    %8 = arith.muli %arg0, %c256_i32 : i32
    %9 = vector.broadcast %8 : i32 to vector<256x1xi32>
    %10 = arith.addi %7, %9 : vector<256x1xi32>
    %c512_i32 = arith.constant 512 : i32
    %11 = vector.broadcast %c512_i32 : i32 to vector<256x1xi32>
    %12 = arith.cmpi slt, %10, %11 : vector<256x1xi32>
    %13 = arith.extui %12 : vector<256x1xi1> to vector<256x1xi32>
    %14 = arith.sitofp %13 : vector<256x1xi32> to vector<256x1xf32>
    %15 = vector.broadcast %14 : vector<256x1xf32> to vector<256x128xf32>
    %16 = arith.mulf %5, %15 : vector<256x128xf32>
    %cst_7 = arith.constant dense<0.000000e+00> : vector<128xf32>
    %17 = vector.multi_reduction <add>, %16, %cst_7 [0] : vector<256x128xf32> to vector<128xf32>
    %18 = vector.shape_cast %17 : vector<128xf32> to vector<1x128xf32>
    %19 = arith.mulf %16, %5 : vector<256x128xf32>
    %cst_8 = arith.constant dense<0.000000e+00> : vector<128xf32>
    %20 = vector.multi_reduction <add>, %19, %cst_8 [0] : vector<256x128xf32> to vector<128xf32>
    %21 = vector.shape_cast %20 : vector<128xf32> to vector<1x128xf32>
    %cst_9 = arith.constant 0.000000e+00 : f32
    %22 = vector.broadcast %cst_9 : f32 to vector<6x128xf32>
    %23 = tpu.concatenate %18, %21, %22 in 0 : vector<1x128xf32>, vector<1x128xf32>, vector<6x128xf32> -> vector<8x128xf32>
    %24 = vector.shape_cast %23 : vector<8x128xf32> to vector<1x8x128xf32>
    %c0_10 = arith.constant 0 : index
    %c0_11 = arith.constant 0 : index
    %c0_12 = arith.constant 0 : index
    %25 = vector.load %arg5[%c0_10, %c0_11, %c0_12] : memref<1x8x128xf32, #tpu.memory_space<vmem>>, vector<1x8x128xf32>
    tpu.vector_store %arg5[%c0_10, %c0_11, %c0_12], %24 {strides = array<i32>} : memref<1x8x128xf32, #tpu.memory_space<vmem>>, vector<1x8x128xf32>,
    return
  }
  func.func @transform_0(%arg0: i32) -> (i32, i32) {
    %c0_i32 = arith.constant 0 : i32
    %c0_i32_0 = arith.constant 0 : i32
    return %arg0, %c0_i32 : i32, i32
  }
  func.func @transform_1(%arg0: i32) -> (i32, i32) {
    %c0_i32 = arith.constant 0 : i32
    %c0_i32_0 = arith.constant 0 : i32
    %c0_i32_1 = arith.constant 0 : i32
    return %c0_i32, %c0_i32_0 : i32, i32
  }
  func.func @transform_2(%arg0: i32) -> (i32, i32) {
    %c0_i32 = arith.constant 0 : i32
    %c0_i32_0 = arith.constant 0 : i32
    %c0_i32_1 = arith.constant 0 : i32
    return %c0_i32, %c0_i32_0 : i32, i32
  }
  func.func @transform_3(%arg0: i32) -> (i32, i32) {
    %c0_i32 = arith.constant 0 : i32
    %c0_i32_0 = arith.constant 0 : i32
    return %arg0, %c0_i32 : i32, i32
  }
  func.func @transform_4(%arg0: i32) -> (i32, i32, i32) {
    %c0_i32 = arith.constant 0 : i32
    %c0_i32_0 = arith.constant 0 : i32
    %c0_i32_1 = arith.constant 0 : i32
    return %arg0, %c0_i32, %c0_i32_0 : i32, i32, i32
  }
}

</mosaic_0001>

<llo_original>
// kernel: double_conv.5
$region0: #{double_conv.5}
  #allocation0 [shape = 'u32[]', space=smem, size = 0x4, offset = 0x4, fixed_abs, tag = 'smem constant byte address 0x4 - core index']
  #allocation1 [shape = 'u32[72,128]{1,0:T(1,128)}', space=vmem, size = 0x9000, scoped, tag = 'internal scratch']
  %s0 = inlined_call_operand.vmem [shape: f32[512,128], index: 0, kind: input, shape index: {}]
  %s1 = inlined_call_operand.vmem [shape: f32[1,128], index: 1, kind: input, shape index: {}]
  %s2 = inlined_call_operand.vmem [shape: f32[1,128], index: 2, kind: input, shape index: {}]
  %s3 = inlined_call_operand.vmem [shape: f32[512,128], index: 3, kind: output, shape index: {}]
  %s4 = sld [smem:[#allocation0]]
  $region45: #{double_conv.5} parent=0
    _
  %s6 = ssub.s32 1, %s4
  %s7 = scalar_select 0, %s6, %s4
  loop: start=0, step=1, limit=4
  $region2: #{double_conv.5} parent=0 // loop_pre_header
    _
  $region3: #{double_conv.5} parent=0 // loop_header
    %s9 = sphi 0, %s13
    %p10 = scmp.ge.s32.totalorder %s9, 4
    %s19 = sphi 0, %s21
    %s22 = sphi 0, %s19
    %s23 = sphi 0, %s22
    %s39 = sphi 0, %s23
    %s43 = sphi 0, %s43
    %s45 = sphi 0, %s43
    %s46 = sphi 0, %s45
    %s60 = sphi 0, %s46
    %s64 = sphi 0, %s64
    %s66 = sphi 0, %s64
    %s67 = sphi 0, %s66
    %s81 = sphi 0, %s67
    %s87 = sphi 0, %s89
    %s90 = sphi 0, %s87
    %s91 = sphi 0, %s90
    %s107 = sphi 0, %s91
  $region4: #{double_conv.5} parent=0 // loop_header_branch
    %12 = sbr.rel (%p10) target = $region8
  $region5: #{double_conv.5} parent=0 // loop_body
    %s14 = ssub.s32 %s9, 1
    %s15 = ssub.s32 %s9, 2
    %s16 = sadd.s32 %s9, 1
    %s17 = ssub.s32 %s9, %s16
    %p18 = scmp.eq.s32.totalorder %s17, 0
    %s20 = sadd.s32 %s19, 1
    %s21 = scalar_select %p18, %s19, %s20
    %p24 = pneg %p18
    %p25 = scmp.eq.s32.totalorder %s9, 1
    %p26 = por %p24, %p25
    %p27 = scmp.ne.s32.totalorder %s19, %s22
    %p28 = scmp.eq.s32.totalorder %s9, 0
    %p29 = por %p27, %p28
    %p30 = scmp.ne.s32.totalorder %s19, %s22
    %p31 = scmp.eq.s32.totalorder %s14, 1
    %p32 = por %p30, %p31
    %p33 = scmp.ne.s32.totalorder %s22, %s23
    %p34 = scmp.eq.s32.totalorder %s14, 0
    %p35 = por %p33, %p34
    %p36 = scmp.ne.s32.totalorder %s22, %s23
    %p37 = scmp.eq.s32.totalorder %s15, 1
    %p38 = por %p36, %p37
    %p40 = scmp.ne.s32.totalorder %s23, %s39
    %p41 = scmp.eq.s32.totalorder %s15, 0
    %p42 = por %p40, %p41
    %s44 = sadd.s32 %s43, 1
    %p47 = scmp.eq.s32.totalorder %s9, 1
    %p48 = scmp.ne.s32.totalorder %s43, %s45
    %p49 = scmp.eq.s32.totalorder %s9, 0
    %p50 = por %p48, %p49
    %p51 = scmp.ne.s32.totalorder %s43, %s45
    %p52 = scmp.eq.s32.totalorder %s14, 1
    %p53 = por %p51, %p52
    %p54 = scmp.ne.s32.totalorder %s45, %s46
    %p55 = scmp.eq.s32.totalorder %s14, 0
    %p56 = por %p54, %p55
    %p57 = scmp.ne.s32.totalorder %s45, %s46
    %p58 = scmp.eq.s32.totalorder %s15, 1
    %p59 = por %p57, %p58
    %p61 = scmp.ne.s32.totalorder %s46, %s60
    %p62 = scmp.eq.s32.totalorder %s15, 0
    %p63 = por %p61, %p62
    %s65 = sadd.s32 %s64, 1
    %p68 = scmp.eq.s32.totalorder %s9, 1
    %p69 = scmp.ne.s32.totalorder %s64, %s66
    %p70 = scmp.eq.s32.totalorder %s9, 0
    %p71 = por %p69, %p70
    %p72 = scmp.ne.s32.totalorder %s64, %s66
    %p73 = scmp.eq.s32.totalorder %s14, 1
    %p74 = por %p72, %p73
    %p75 = scmp.ne.s32.totalorder %s66, %s67
    %p76 = scmp.eq.s32.totalorder %s14, 0
    %p77 = por %p75, %p76
    %p78 = scmp.ne.s32.totalorder %s66, %s67
    %p79 = scmp.eq.s32.totalorder %s15, 1
    %p80 = por %p78, %p79
    %p82 = scmp.ne.s32.totalorder %s67, %s81
    %p83 = scmp.eq.s32.totalorder %s15, 0
    %p84 = por %p82, %p83
    %s85 = ssub.s32 %s9, %s16
    %p86 = scmp.eq.s32.totalorder %s85, 0
    %s88 = sadd.s32 %s87, 1
    %s89 = scalar_select %p86, %s87, %s88
    %p92 = pneg %p86
    %p93 = scmp.eq.s32.totalorder %s9, 1
    %p94 = por %p92, %p93
    %p95 = scmp.ne.s32.totalorder %s87, %s90
    %p96 = scmp.eq.s32.totalorder %s9, 0
    %p97 = por %p95, %p96
    %p98 = scmp.ne.s32.totalorder %s87, %s90
    %p99 = scmp.eq.s32.totalorder %s14, 1
    %p100 = por %p98, %p99
    %p101 = scmp.ne.s32.totalorder %s90, %s91
    %p102 = scmp.eq.s32.totalorder %s14, 0
    %p103 = por %p101, %p102
    %p104 = scmp.ne.s32.totalorder %s90, %s91
    %p105 = scmp.eq.s32.totalorder %s15, 1
    %p106 = por %p104, %p105
    %p108 = scmp.ne.s32.totalorder %s91, %s107
    %p109 = scmp.eq.s32.totalorder %s15, 0
    %p110 = por %p108, %p109
    %p111 = scmp.le.s32.totalorder 1, %s9
    %p112 = scmp.lt.s32.totalorder %s9, 3
    %p113 = pnand %p111, %p112
    %p114 = pneg %p113
    // Predicated region
    $region9: #{double_conv.5} parent=5 // pred_check
      _
    $region10: #{double_conv.5} parent=5 // pred_check_branch
      %116 = sbr.rel (%p113) target = $region12
    $region11: #{double_conv.5} parent=5 // pred_region
      %s117 = ssub.s32 %s9, 1
      // Predicated region
      $region13: #{double_conv.5} parent=11 // pred_check
        %p118 = pneg %p56
      $region14: #{double_conv.5} parent=11 // pred_check_branch
        %120 = sbr.rel (%p118) target = $region16
      $region15: #{double_conv.5} parent=11 // pred_region
        _
      $region16: #{double_conv.5} parent=11 // pred_fallthru
        _
      // Predicated region
      $region17: #{double_conv.5} parent=11 // pred_check
        %p121 = pneg %p77
      $region18: #{double_conv.5} parent=11 // pred_check_branch
        %123 = sbr.rel (%p121) target = $region20
      $region19: #{double_conv.5} parent=11 // pred_region
        _
      $region20: #{double_conv.5} parent=11 // pred_fallthru
        _
    $region12: #{double_conv.5} parent=5 // pred_fallthru
      _
    %p124 = scmp.lt.s32.totalorder %s9, 2
    // Predicated region
    $region21: #{double_conv.5} parent=5 // pred_check
      %p125 = pneg %p124
    $region22: #{double_conv.5} parent=5 // pred_check_branch
      %127 = sbr.rel (%p125) target = $region24
    $region23: #{double_conv.5} parent=5 // pred_region
      // Predicated region
      $region25: #{double_conv.5} parent=23 // pred_check
        %p128 = pneg %p29
      $region26: #{double_conv.5} parent=23 // pred_check_branch
        %130 = sbr.rel (%p128) target = $region28
      $region27: #{double_conv.5} parent=23 // pred_region
        %s131 = smul.u32 32, %s9
        %p132 = scmp.lt.s32.totalorder %s131, 63
        %s133 = scalar_select %p132, %s131, 63
        %s134 = smul.addr %s133, 8
        %s135 = scalar_lea.vmem %s0, %s134
        %s136 = smul.u32 32, %s9
      $region28: #{double_conv.5} parent=23 // pred_fallthru
        _
    $region24: #{double_conv.5} parent=5 // pred_fallthru
      _
    %p137 = scmp.le.s32.totalorder 1, %s9
    %p138 = scmp.lt.s32.totalorder %s9, 3
    %p139 = pnand %p137, %p138
    %p140 = pneg %p139
    // Predicated region
    $region29: #{double_conv.5} parent=5 // pred_check
      _
    $region30: #{double_conv.5} parent=5 // pred_check_branch
      %142 = sbr.rel (%p139) target = $region32
    $region31: #{double_conv.5} parent=5 // pred_region
      %s143 = ssub.s32 %s9, 1
      %s144 = smul.u32 32, %s14
      %p145 = scmp.lt.s32.totalorder %s144, 63
      %s146 = scalar_select %p145, %s144, 63
      %s147 = smul.addr %s146, 8
      %s148 = scalar_lea.vmem %s0, %s147
      %p149 = pneg %p35
      %p150 = pneg %p32
      %p151 = pneg %p56
      %p152 = pneg %p53
      %p153 = pneg %p77
      %p154 = pneg %p74
      %p155 = pneg %p103
      %p156 = pneg %p100
      %s157 = smul.u32 32, %s14
      %p158 = scmp.lt.s32.totalorder %s157, 63
      %s159 = scalar_select %p158, %s157, 63
      %s160 = smul.addr %s159, 8
      %s161 = scalar_lea.vmem %s3, %s160
      %s162 = smul.u32 32, %s14
      %p163 = scmp.lt.s32.totalorder %s162, 63
      %s164 = scalar_select %p163, %s162, 63
      %s165 = smul.addr %s164, 8
      %s166 = scalar_lea.vmem %s0, %s165
      %s167 = smul.u32 32, %s14
      %s168 = smul.u32 32, %s14
      %p169 = scmp.lt.s32.totalorder %s168, 63
      %s170 = scalar_select %p169, %s168, 63
      %s171 = smul.addr %s170, 8
      %s172 = scalar_lea.vmem %s3, %s171
      %s173 = smul.u32 32, %s14
      %v174 = vld [vmem:[%s166] sm:$0xff]
      %v175 = vld [vmem:[%s166 + $0x8] sm:$0xff]
      %v176 = vld [vmem:[%s166 + $0x10] sm:$0xff]
      %v177 = vld [vmem:[%s166 + $0x18] sm:$0xff]
      %v178 = vld [vmem:[%s166 + $0x20] sm:$0xff]
      %v179 = vld [vmem:[%s166 + $0x28] sm:$0xff]
      %v180 = vld [vmem:[%s166 + $0x30] sm:$0xff]
      %v181 = vld [vmem:[%s166 + $0x38] sm:$0xff]
      %v182 = vld [vmem:[%s166 + $0x40] sm:$0xff]
      %v183 = vld [vmem:[%s166 + $0x48] sm:$0xff]
      %v184 = vld [vmem:[%s166 + $0x50] sm:$0xff]
      %v185 = vld [vmem:[%s166 + $0x58] sm:$0xff]
      %v186 = vld [vmem:[%s166 + $0x60] sm:$0xff]
      %v187 = vld [vmem:[%s166 + $0x68] sm:$0xff]
      %v188 = vld [vmem:[%s166 + $0x70] sm:$0xff]
      %v189 = vld [vmem:[%s166 + $0x78] sm:$0xff]
      %v190 = vld [vmem:[%s166 + $0x80] sm:$0xff]
      %v191 = vld [vmem:[%s166 + $0x88] sm:$0xff]
      %v192 = vld [vmem:[%s166 + $0x90] sm:$0xff]
      %v193 = vld [vmem:[%s166 + $0x98] sm:$0xff]
      %v194 = vld [vmem:[%s166 + $0xa0] sm:$0xff]
      %v195 = vld [vmem:[%s166 + $0xa8] sm:$0xff]
      %v196 = vld [vmem:[%s166 + $0xb0] sm:$0xff]
      %v197 = vld [vmem:[%s166 + $0xb8] sm:$0xff]
      %v198 = vld [vmem:[%s166 + $0xc0] sm:$0xff]
      %v199 = vld [vmem:[%s166 + $0xc8] sm:$0xff]
      %v200 = vld [vmem:[%s166 + $0xd0] sm:$0xff]
      %v201 = vld [vmem:[%s166 + $0xd8] sm:$0xff]
      %v202 = vld [vmem:[%s166 + $0xe0] sm:$0xff]
      %v203 = vld [vmem:[%s166 + $0xe8] sm:$0xff]
      %v204 = vld [vmem:[%s166 + $0xf0] sm:$0xff]
      %v205 = vld [vmem:[%s166 + $0xf8] sm:$0xff]
      %v206 = vld [vmem:[%s1] sm:$0x1]
      %v208 = vperm.slane %v206, 0
      %v210 = vmul.f32 %v174, %v208
      %v211 = vmul.f32 %v175, %v208
      %v212 = vmul.f32 %v176, %v208
      %v213 = vmul.f32 %v177, %v208
      %v214 = vmul.f32 %v178, %v208
      %v215 = vmul.f32 %v179, %v208
      %v216 = vmul.f32 %v180, %v208
      %v217 = vmul.f32 %v181, %v208
      %v218 = vmul.f32 %v182, %v208
      %v219 = vmul.f32 %v183, %v208
      %v220 = vmul.f32 %v184, %v208
      %v221 = vmul.f32 %v185, %v208
      %v222 = vmul.f32 %v186, %v208
      %v223 = vmul.f32 %v187, %v208
      %v224 = vmul.f32 %v188, %v208
      %v225 = vmul.f32 %v189, %v208
      %v226 = vmul.f32 %v190, %v208
      %v227 = vmul.f32 %v191, %v208
      %v228 = vmul.f32 %v192, %v208
      %v229 = vmul.f32 %v193, %v208
      %v230 = vmul.f32 %v194, %v208
      %v231 = vmul.f32 %v195, %v208
      %v232 = vmul.f32 %v196, %v208
      %v233 = vmul.f32 %v197, %v208
      %v234 = vmul.f32 %v198, %v208
      %v235 = vmul.f32 %v199, %v208
      %v236 = vmul.f32 %v200, %v208
      %v237 = vmul.f32 %v201, %v208
      %v238 = vmul.f32 %v202, %v208
      %v239 = vmul.f32 %v203, %v208
      %v240 = vmul.f32 %v204, %v208
      %v241 = vmul.f32 %v205, %v208
      %v242 = vld [vmem:[%s2] sm:$0x1]
      %v244 = vperm.slane %v242, 0
      %v246 = vadd.f32 %v210, %v244
      %v247 = vadd.f32 %v211, %v244
      %v248 = vadd.f32 %v212, %v244
      %v249 = vadd.f32 %v213, %v244
      %v250 = vadd.f32 %v214, %v244
      %v251 = vadd.f32 %v215, %v244
      %v252 = vadd.f32 %v216, %v244
      %v253 = vadd.f32 %v217, %v244
      %v254 = vadd.f32 %v218, %v244
      %v255 = vadd.f32 %v219, %v244
      %v256 = vadd.f32 %v220, %v244
      %v257 = vadd.f32 %v221, %v244
      %v258 = vadd.f32 %v222, %v244
      %v259 = vadd.f32 %v223, %v244
      %v260 = vadd.f32 %v224, %v244
      %v261 = vadd.f32 %v225, %v244
      %v262 = vadd.f32 %v226, %v244
      %v263 = vadd.f32 %v227, %v244
      %v264 = vadd.f32 %v228, %v244
      %v265 = vadd.f32 %v229, %v244
      %v266 = vadd.f32 %v230, %v244
      %v267 = vadd.f32 %v231, %v244
      %v268 = vadd.f32 %v232, %v244
      %v269 = vadd.f32 %v233, %v244
      %v270 = vadd.f32 %v234, %v244
      %v271 = vadd.f32 %v235, %v244
      %v272 = vadd.f32 %v236, %v244
      %v273 = vadd.f32 %v237, %v244
      %v274 = vadd.f32 %v238, %v244
      %v275 = vadd.f32 %v239, %v244
      %v276 = vadd.f32 %v240, %v244
      %v277 = vadd.f32 %v241, %v244
      %v278 = vmax.f32 %v246, 0.0
      %v279 = vmax.f32 %v247, 0.0
      %v280 = vmax.f32 %v248, 0.0
      %v281 = vmax.f32 %v249, 0.0
      %v282 = vmax.f32 %v250, 0.0
      %v283 = vmax.f32 %v251, 0.0
      %v284 = vmax.f32 %v252, 0.0
      %v285 = vmax.f32 %v253, 0.0
      %v286 = vmax.f32 %v254, 0.0
      %v287 = vmax.f32 %v255, 0.0
      %v288 = vmax.f32 %v256, 0.0
      %v289 = vmax.f32 %v257, 0.0
      %v290 = vmax.f32 %v258, 0.0
      %v291 = vmax.f32 %v259, 0.0
      %v292 = vmax.f32 %v260, 0.0
      %v293 = vmax.f32 %v261, 0.0
      %v294 = vmax.f32 %v262, 0.0
      %v295 = vmax.f32 %v263, 0.0
      %v296 = vmax.f32 %v264, 0.0
      %v297 = vmax.f32 %v265, 0.0
      %v298 = vmax.f32 %v266, 0.0
      %v299 = vmax.f32 %v267, 0.0
      %v300 = vmax.f32 %v268, 0.0
      %v301 = vmax.f32 %v269, 0.0
      %v302 = vmax.f32 %v270, 0.0
      %v303 = vmax.f32 %v271, 0.0
      %v304 = vmax.f32 %v272, 0.0
      %v305 = vmax.f32 %v273, 0.0
      %v306 = vmax.f32 %v274, 0.0
      %v307 = vmax.f32 %v275, 0.0
      %v308 = vmax.f32 %v276, 0.0
      %v309 = vmax.f32 %v277, 0.0
      %310 = vst [vmem:[%s172] sm:$0xff] %v278
      %311 = vst [vmem:[%s172 + $0x8] sm:$0xff] %v279
      %312 = vst [vmem:[%s172 + $0x10] sm:$0xff] %v280
      %313 = vst [vmem:[%s172 + $0x18] sm:$0xff] %v281
      %314 = vst [vmem:[%s172 + $0x20] sm:$0xff] %v282
      %315 = vst [vmem:[%s172 + $0x28] sm:$0xff] %v283
      %316 = vst [vmem:[%s172 + $0x30] sm:$0xff] %v284
      %317 = vst [vmem:[%s172 + $0x38] sm:$0xff] %v285
      %318 = vst [vmem:[%s172 + $0x40] sm:$0xff] %v286
      %319 = vst [vmem:[%s172 + $0x48] sm:$0xff] %v287
      %320 = vst [vmem:[%s172 + $0x50] sm:$0xff] %v288
      %321 = vst [vmem:[%s172 + $0x58] sm:$0xff] %v289
      %322 = vst [vmem:[%s172 + $0x60] sm:$0xff] %v290
      %323 = vst [vmem:[%s172 + $0x68] sm:$0xff] %v291
      %324 = vst [vmem:[%s172 + $0x70] sm:$0xff] %v292
      %325 = vst [vmem:[%s172 + $0x78] sm:$0xff] %v293
      %326 = vst [vmem:[%s172 + $0x80] sm:$0xff] %v294
      %327 = vst [vmem:[%s172 + $0x88] sm:$0xff] %v295
      %328 = vst [vmem:[%s172 + $0x90] sm:$0xff] %v296
      %329 = vst [vmem:[%s172 + $0x98] sm:$0xff] %v297
      %330 = vst [vmem:[%s172 + $0xa0] sm:$0xff] %v298
      %331 = vst [vmem:[%s172 + $0xa8] sm:$0xff] %v299
      %332 = vst [vmem:[%s172 + $0xb0] sm:$0xff] %v300
      %333 = vst [vmem:[%s172 + $0xb8] sm:$0xff] %v301
      %334 = vst [vmem:[%s172 + $0xc0] sm:$0xff] %v302
      %335 = vst [vmem:[%s172 + $0xc8] sm:$0xff] %v303
      %336 = vst [vmem:[%s172 + $0xd0] sm:$0xff] %v304
      %337 = vst [vmem:[%s172 + $0xd8] sm:$0xff] %v305
      %338 = vst [vmem:[%s172 + $0xe0] sm:$0xff] %v306
      %339 = vst [vmem:[%s172 + $0xe8] sm:$0xff] %v307
      %340 = vst [vmem:[%s172 + $0xf0] sm:$0xff] %v308
      %341 = vst [vmem:[%s172 + $0xf8] sm:$0xff] %v309
      %s342 = smul.u32 32, %s14
      %p343 = scmp.lt.s32.totalorder %s342, 63
      %s344 = scalar_select %p343, %s342, 63
      %s345 = smul.addr %s344, 8
      %s346 = scalar_lea.vmem %s3, %s345
      // Predicated region
      $region33: #{double_conv.5} parent=31 // pred_check
        %p347 = pneg %p100
      $region34: #{double_conv.5} parent=31 // pred_check_branch
        %349 = sbr.rel (%p347) target = $region36
      $region35: #{double_conv.5} parent=31 // pred_region
        %s350 = smul.u32 32, %s14
      $region36: #{double_conv.5} parent=31 // pred_fallthru
        _
    $region32: #{double_conv.5} parent=5 // pred_fallthru
      _
    %p351 = scmp.le.s32.totalorder 2, %s9
    // Predicated region
    $region37: #{double_conv.5} parent=5 // pred_check
      %p352 = pneg %p351
    $region38: #{double_conv.5} parent=5 // pred_check_branch
      %354 = sbr.rel (%p352) target = $region40
    $region39: #{double_conv.5} parent=5 // pred_region
      %s355 = ssub.s32 %s9, 2
      // Predicated region
      $region41: #{double_conv.5} parent=39 // pred_check
        %p356 = pneg %p106
      $region42: #{double_conv.5} parent=39 // pred_check_branch
        %358 = sbr.rel (%p356) target = $region44
      $region43: #{double_conv.5} parent=39 // pred_region
        %s359 = smul.u32 32, %s15
        %p360 = scmp.lt.s32.totalorder %s359, 63
        %s361 = scalar_select %p360, %s359, 63
        %s362 = smul.addr %s361, 8
        %s363 = scalar_lea.vmem %s3, %s362
      $region44: #{double_conv.5} parent=39 // pred_fallthru
        _
    $region40: #{double_conv.5} parent=5 // pred_fallthru
      _
  $region6: #{double_conv.5} parent=0 // loop_footer
    %s13 = sadd.s32 1, %s9
  $region7: #{double_conv.5} parent=0 // loop_footer_branch
    %8 = sbr.rel target = $region3
  $region8: #{double_conv.5} parent=0 // loop_exit
    _

// kernel: double_conv.4
$region0: #{double_conv.4}
  #allocation0 [shape = 'u32[]', space=smem, size = 0x4, offset = 0x4, fixed_abs, tag = 'smem constant byte address 0x4 - core index']
  #allocation1 [shape = 'u32[72,128]{1,0:T(1,128)}', space=vmem, size = 0x9000, scoped, tag = 'internal scratch']
  %s0 = inlined_call_operand.vmem [shape: bf16[512,36], index: 0, kind: input, shape index: {}]
  %s1 = inlined_call_operand.vmem [shape: bf16[36,128], index: 1, kind: input, shape index: {}]
  %s2 = inlined_call_operand.vmem [shape: f32[1,128], index: 2, kind: input, shape index: {}]
  %s3 = inlined_call_operand.vmem [shape: f32[512,128], index: 3, kind: output, shape index: {0}]
  %s4 = inlined_call_operand.vmem [shape: f32[2,8,128], index: 4, kind: output, shape index: {1}]
  %5 = xla_tuple %s3, %s4
  %s6 = sld [smem:[#allocation0]]
  $region53: #{double_conv.4} parent=0
    _
  %s8 = ssub.s32 1, %s6
  %s9 = scalar_select 0, %s8, %s6
  loop: start=0, step=1, limit=4
  $region2: #{double_conv.4} parent=0 // loop_pre_header
    _
  $region3: #{double_conv.4} parent=0 // loop_header
    %s11 = sphi 0, %s15
    %p12 = scmp.ge.s32.totalorder %s11, 4
    %s21 = sphi 0, %s23
    %s24 = sphi 0, %s21
    %s25 = sphi 0, %s24
    %s41 = sphi 0, %s25
    %s45 = sphi 0, %s45
    %s47 = sphi 0, %s45
    %s48 = sphi 0, %s47
    %s62 = sphi 0, %s48
    %s66 = sphi 0, %s66
    %s68 = sphi 0, %s66
    %s69 = sphi 0, %s68
    %s83 = sphi 0, %s69
    %s89 = sphi 0, %s91
    %s92 = sphi 0, %s89
    %s93 = sphi 0, %s92
    %s109 = sphi 0, %s93
    %s115 = sphi 0, %s117
    %s118 = sphi 0, %s115
    %s119 = sphi 0, %s118
    %s135 = sphi 0, %s119
  $region4: #{double_conv.4} parent=0 // loop_header_branch
    %14 = sbr.rel (%p12) target = $region8
  $region5: #{double_conv.4} parent=0 // loop_body
    %s16 = ssub.s32 %s11, 1
    %s17 = ssub.s32 %s11, 2
    %s18 = sadd.s32 %s11, 1
    %s19 = ssub.s32 %s11, %s18
    %p20 = scmp.eq.s32.totalorder %s19, 0
    %s22 = sadd.s32 %s21, 1
    %s23 = scalar_select %p20, %s21, %s22
    %p26 = pneg %p20
    %p27 = scmp.eq.s32.totalorder %s11, 1
    %p28 = por %p26, %p27
    %p29 = scmp.ne.s32.totalorder %s21, %s24
    %p30 = scmp.eq.s32.totalorder %s11, 0
    %p31 = por %p29, %p30
    %p32 = scmp.ne.s32.totalorder %s21, %s24
    %p33 = scmp.eq.s32.totalorder %s16, 1
    %p34 = por %p32, %p33
    %p35 = scmp.ne.s32.totalorder %s24, %s25
    %p36 = scmp.eq.s32.totalorder %s16, 0
    %p37 = por %p35, %p36
    %p38 = scmp.ne.s32.totalorder %s24, %s25
    %p39 = scmp.eq.s32.totalorder %s17, 1
    %p40 = por %p38, %p39
    %p42 = scmp.ne.s32.totalorder %s25, %s41
    %p43 = scmp.eq.s32.totalorder %s17, 0
    %p44 = por %p42, %p43
    %s46 = sadd.s32 %s45, 1
    %p49 = scmp.eq.s32.totalorder %s11, 1
    %p50 = scmp.ne.s32.totalorder %s45, %s47
    %p51 = scmp.eq.s32.totalorder %s11, 0
    %p52 = por %p50, %p51
    %p53 = scmp.ne.s32.totalorder %s45, %s47
    %p54 = scmp.eq.s32.totalorder %s16, 1
    %p55 = por %p53, %p54
    %p56 = scmp.ne.s32.totalorder %s47, %s48
    %p57 = scmp.eq.s32.totalorder %s16, 0
    %p58 = por %p56, %p57
    %p59 = scmp.ne.s32.totalorder %s47, %s48
    %p60 = scmp.eq.s32.totalorder %s17, 1
    %p61 = por %p59, %p60
    %p63 = scmp.ne.s32.totalorder %s48, %s62
    %p64 = scmp.eq.s32.totalorder %s17, 0
    %p65 = por %p63, %p64
    %s67 = sadd.s32 %s66, 1
    %p70 = scmp.eq.s32.totalorder %s11, 1
    %p71 = scmp.ne.s32.totalorder %s66, %s68
    %p72 = scmp.eq.s32.totalorder %s11, 0
    %p73 = por %p71, %p72
    %p74 = scmp.ne.s32.totalorder %s66, %s68
    %p75 = scmp.eq.s32.totalorder %s16, 1
    %p76 = por %p74, %p75
    %p77 = scmp.ne.s32.totalorder %s68, %s69
    %p78 = scmp.eq.s32.totalorder %s16, 0
    %p79 = por %p77, %p78
    %p80 = scmp.ne.s32.totalorder %s68, %s69
    %p81 = scmp.eq.s32.totalorder %s17, 1
    %p82 = por %p80, %p81
    %p84 = scmp.ne.s32.totalorder %s69, %s83
    %p85 = scmp.eq.s32.totalorder %s17, 0
    %p86 = por %p84, %p85
    %s87 = ssub.s32 %s11, %s18
    %p88 = scmp.eq.s32.totalorder %s87, 0
    %s90 = sadd.s32 %s89, 1
    %s91 = scalar_select %p88, %s89, %s90
    %p94 = pneg %p88
    %p95 = scmp.eq.s32.totalorder %s11, 1
    %p96 = por %p94, %p95
    %p97 = scmp.ne.s32.totalorder %s89, %s92
    %p98 = scmp.eq.s32.totalorder %s11, 0
    %p99 = por %p97, %p98
    %p100 = scmp.ne.s32.totalorder %s89, %s92
    %p101 = scmp.eq.s32.totalorder %s16, 1
    %p102 = por %p100, %p101
    %p103 = scmp.ne.s32.totalorder %s92, %s93
    %p104 = scmp.eq.s32.totalorder %s16, 0
    %p105 = por %p103, %p104
    %p106 = scmp.ne.s32.totalorder %s92, %s93
    %p107 = scmp.eq.s32.totalorder %s17, 1
    %p108 = por %p106, %p107
    %p110 = scmp.ne.s32.totalorder %s93, %s109
    %p111 = scmp.eq.s32.totalorder %s17, 0
    %p112 = por %p110, %p111
    %s113 = ssub.s32 %s11, %s18
    %p114 = scmp.eq.s32.totalorder %s113, 0
    %s116 = sadd.s32 %s115, 1
    %s117 = scalar_select %p114, %s115, %s116
    %p120 = pneg %p114
    %p121 = scmp.eq.s32.totalorder %s11, 1
    %p122 = por %p120, %p121
    %p123 = scmp.ne.s32.totalorder %s115, %s118
    %p124 = scmp.eq.s32.totalorder %s11, 0
    %p125 = por %p123, %p124
    %p126 = scmp.ne.s32.totalorder %s115, %s118
    %p127 = scmp.eq.s32.totalorder %s16, 1
    %p128 = por %p126, %p127
    %p129 = scmp.ne.s32.totalorder %s118, %s119
    %p130 = scmp.eq.s32.totalorder %s16, 0
    %p131 = por %p129, %p130
    %p132 = scmp.ne.s32.totalorder %s118, %s119
    %p133 = scmp.eq.s32.totalorder %s17, 1
    %p134 = por %p132, %p133
    %p136 = scmp.ne.s32.totalorder %s119, %s135
    %p137 = scmp.eq.s32.totalorder %s17, 0
    %p138 = por %p136, %p137
    %p139 = scmp.le.s32.totalorder 1, %s11
    %p140 = scmp.lt.s32.totalorder %s11, 3
    %p141 = pnand %p139, %p140
    %p142 = pneg %p141
    // Predicated region
    $region9: #{double_conv.4} parent=5 // pred_check
      _
    $region10: #{double_conv.4} parent=5 // pred_check_branch
      %144 = sbr.rel (%p141) target = $region12
    $region11: #{double_conv.4} parent=5 // pred_region
      %s145 = ssub.s32 %s11, 1
      // Predicated region
      $region13: #{double_conv.4} parent=11 // pred_check
        %p146 = pneg %p58
      $region14: #{double_conv.4} parent=11 // pred_check_branch
        %148 = sbr.rel (%p146) target = $region16
      $region15: #{double_conv.4} parent=11 // pred_region
        _
      $region16: #{double_conv.4} parent=11 // pred_fallthru
        _
      // Predicated region
      $region17: #{double_conv.4} parent=11 // pred_check
        %p149 = pneg %p79
      $region18: #{double_conv.4} parent=11 // pred_check_branch
        %151 = sbr.rel (%p149) target = $region20
      $region19: #{double_conv.4} parent=11 // pred_region
        _
      $region20: #{double_conv.4} parent=11 // pred_fallthru
        _
    $region12: #{double_conv.4} parent=5 // pred_fallthru
      _
    %p152 = scmp.lt.s32.totalorder %s11, 2
    // Predicated region
    $region21: #{double_conv.4} parent=5 // pred_check
      %p153 = pneg %p152
    $region22: #{double_conv.4} parent=5 // pred_check_branch
      %155 = sbr.rel (%p153) target = $region24
    $region23: #{double_conv.4} parent=5 // pred_region
      // Predicated region
      $region25: #{double_conv.4} parent=23 // pred_check
        %p156 = pneg %p31
      $region26: #{double_conv.4} parent=23 // pred_check_branch
        %158 = sbr.rel (%p156) target = $region28
      $region27: #{double_conv.4} parent=23 // pred_region
        %s159 = smul.u32 32, %s11
        %p160 = scmp.lt.s32.totalorder %s159, 63
        %s161 = scalar_select %p160, %s159, 63
        %s162 = smul.addr %s161, 4
        %s163 = scalar_lea.vmem %s0, %s162
        %s164 = smul.u32 32, %s11
      $region28: #{double_conv.4} parent=23 // pred_fallthru
        _
    $region24: #{double_conv.4} parent=5 // pred_fallthru
      _
    %p165 = scmp.le.s32.totalorder 1, %s11
    %p166 = scmp.lt.s32.totalorder %s11, 3
    %p167 = pnand %p165, %p166
    %p168 = pneg %p167
    // Predicated region
    $region29: #{double_conv.4} parent=5 // pred_check
      _
    $region30: #{double_conv.4} parent=5 // pred_check_branch
      %170 = sbr.rel (%p167) target = $region32
    $region31: #{double_conv.4} parent=5 // pred_region
      %s171 = ssub.s32 %s11, 1
      %s172 = smul.u32 32, %s16
      %p173 = scmp.lt.s32.totalorder %s172, 63
      %s174 = scalar_select %p173, %s172, 63
      %s175 = smul.addr %s174, 4
      %s176 = scalar_lea.vmem %s0, %s175
      %p177 = pneg %p37
      %p178 = pneg %p34
      %p179 = pneg %p58
      %p180 = pneg %p55
      %p181 = pneg %p79
      %p182 = pneg %p76
      %p183 = pneg %p105
      %p184 = pneg %p102
      %s185 = smul.u32 32, %s16
      %p186 = scmp.lt.s32.totalorder %s185, 63
      %s187 = scalar_select %p186, %s185, 63
      %s188 = smul.addr %s187, 8
      %s189 = scalar_lea.vmem %s3, %s188
      %p190 = pneg %p131
      %p191 = pneg %p128
      %p192 = scmp.lt.s32.totalorder %s16, 1
      %s193 = scalar_select %p192, %s16, 1
      %s194 = smul.addr %s193, 8
      %s195 = scalar_lea.vmem %s4, %s194
      %s196 = smul.u32 32, %s16
      %p197 = scmp.lt.s32.totalorder %s196, 63
      %s198 = scalar_select %p197, %s196, 63
      %s199 = smul.addr %s198, 4
      %s200 = scalar_lea.vmem %s0, %s199
      %s201 = smul.u32 32, %s16
      %s202 = smul.u32 32, %s16
      %p203 = scmp.lt.s32.totalorder %s202, 63
      %s204 = scalar_select %p203, %s202, 63
      %s205 = smul.addr %s204, 8
      %s206 = scalar_lea.vmem %s3, %s205
      %s207 = smul.u32 32, %s16
      %p208 = scmp.lt.s32.totalorder %s16, 1
      %s209 = scalar_select %p208, %s16, 1
      %s210 = smul.addr %s209, 8
      %s211 = scalar_lea.vmem %s4, %s210
      %v213 = vld [vmem:[%s200] sm:$0xf]
      %v214 = vld [vmem:[%s200 + $0x4] sm:$0xf]
      %v215 = vld [vmem:[%s200 + $0x8] sm:$0xf]
      %v216 = vld [vmem:[%s200 + $0xc] sm:$0xf]
      %v217 = vld [vmem:[%s200 + $0x10] sm:$0xf]
      %v218 = vld [vmem:[%s200 + $0x14] sm:$0xf]
      %v219 = vld [vmem:[%s200 + $0x18] sm:$0xf]
      %v220 = vld [vmem:[%s200 + $0x1c] sm:$0xf]
      %v221 = vld [vmem:[%s200 + $0x20] sm:$0xf]
      %v222 = vld [vmem:[%s200 + $0x24] sm:$0xf]
      %v223 = vld [vmem:[%s200 + $0x28] sm:$0xf]
      %v224 = vld [vmem:[%s200 + $0x2c] sm:$0xf]
      %v225 = vld [vmem:[%s200 + $0x30] sm:$0xf]
      %v226 = vld [vmem:[%s200 + $0x34] sm:$0xf]
      %v227 = vld [vmem:[%s200 + $0x38] sm:$0xf]
      %v228 = vld [vmem:[%s200 + $0x3c] sm:$0xf]
      %v229 = vld [vmem:[%s200 + $0x40] sm:$0xf]
      %v230 = vld [vmem:[%s200 + $0x44] sm:$0xf]
      %v231 = vld [vmem:[%s200 + $0x48] sm:$0xf]
      %v232 = vld [vmem:[%s200 + $0x4c] sm:$0xf]
      %v233 = vld [vmem:[%s200 + $0x50] sm:$0xf]
      %v234 = vld [vmem:[%s200 + $0x54] sm:$0xf]
      %v235 = vld [vmem:[%s200 + $0x58] sm:$0xf]
      %v236 = vld [vmem:[%s200 + $0x5c] sm:$0xf]
      %v237 = vld [vmem:[%s200 + $0x60] sm:$0xf]
      %v238 = vld [vmem:[%s200 + $0x64] sm:$0xf]
      %v239 = vld [vmem:[%s200 + $0x68] sm:$0xf]
      %v240 = vld [vmem:[%s200 + $0x6c] sm:$0xf]
      %v241 = vld [vmem:[%s200 + $0x70] sm:$0xf]
      %v242 = vld [vmem:[%s200 + $0x74] sm:$0xf]
      %v243 = vld [vmem:[%s200 + $0x78] sm:$0xf]
      %v244 = vld [vmem:[%s200 + $0x7c] sm:$0xf]
      %v245 = vld [vmem:[%s1] sm:$0xf]
      %v246 = vld [vmem:[%s1 + $0x4] sm:$0xf]
      %v247 = vld [vmem:[%s1 + $0x8] sm:$0xf]
      %v248 = vld [vmem:[%s1 + $0xc] sm:$0xf]
      %v249 = vld [vmem:[%s1 + $0x10] sm:$0x3]
      %v250 = vld [vmem:[%s2] sm:$0x1]
      %v252 = vperm.slane %v250, 0
      %v286 = vunpack.c.l.b16 %v213
      %v287 = vunpack.c.l.b16 %v214
      %v288 = vunpack.c.l.b16 %v215
      %v289 = vunpack.c.l.b16 %v216
      %v290 = vunpack.c.l.b16 %v217
      %v291 = vunpack.c.l.b16 %v218
      %v292 = vunpack.c.l.b16 %v219
      %v293 = vunpack.c.l.b16 %v220
      %v294 = vunpack.c.l.b16 %v221
      %v295 = vunpack.c.l.b16 %v222
      %v296 = vunpack.c.l.b16 %v223
      %v297 = vunpack.c.l.b16 %v224
      %v298 = vunpack.c.l.b16 %v225
      %v299 = vunpack.c.l.b16 %v226
      %v300 = vunpack.c.l.b16 %v227
      %v301 = vunpack.c.l.b16 %v228
      %v302 = vunpack.c.l.b16 %v229
      %v303 = vunpack.c.l.b16 %v230
      %v304 = vunpack.c.l.b16 %v231
      %v305 = vunpack.c.l.b16 %v232
      %v306 = vunpack.c.l.b16 %v233
      %v307 = vunpack.c.l.b16 %v234
      %v308 = vunpack.c.l.b16 %v235
      %v309 = vunpack.c.l.b16 %v236
      %v310 = vunpack.c.l.b16 %v237
      %v311 = vunpack.c.l.b16 %v238
      %v312 = vunpack.c.l.b16 %v239
      %v313 = vunpack.c.l.b16 %v240
      %v314 = vunpack.c.l.b16 %v241
      %v315 = vunpack.c.l.b16 %v242
      %v316 = vunpack.c.l.b16 %v243
      %v317 = vunpack.c.l.b16 %v244
      %v318 = vpack.c.b16 %v287, %v286
      %v319 = vpack.c.b16 %v289, %v288
      %v320 = vpack.c.b16 %v291, %v290
      %v321 = vpack.c.b16 %v293, %v292
      %v322 = vpack.c.b16 %v295, %v294
      %v323 = vpack.c.b16 %v297, %v296
      %v324 = vpack.c.b16 %v299, %v298
      %v325 = vpack.c.b16 %v301, %v300
      %v326 = vpack.c.b16 %v303, %v302
      %v327 = vpack.c.b16 %v305, %v304
      %v328 = vpack.c.b16 %v307, %v306
      %v329 = vpack.c.b16 %v309, %v308
      %v330 = vpack.c.b16 %v311, %v310
      %v331 = vpack.c.b16 %v313, %v312
      %v332 = vpack.c.b16 %v315, %v314
      %v333 = vpack.c.b16 %v317, %v316
      %v339 = vunpack.c.l.b16 %v245
      %v340 = vunpack.c.l.b16 %v246
      %v341 = vunpack.c.l.b16 %v247
      %v342 = vunpack.c.l.b16 %v248
      %v343 = vunpack.c.l.b16 %v249
      %v344 = vpack.c.b16 %v340, %v339
      %v345 = vpack.c.b16 %v342, %v341
      %v346 = vpack.c.b16 %v343, %v343
      %vm349 = vcmask 293888
      %v351 = vsel %vm349, %v318, 0
      %v354 = vsel %vm349, %v319, 0
      %v357 = vsel %vm349, %v320, 0
      %v360 = vsel %vm349, %v321, 0
      %v363 = vsel %vm349, %v322, 0
      %v366 = vsel %vm349, %v323, 0
      %v369 = vsel %vm349, %v324, 0
      %v372 = vsel %vm349, %v325, 0
      %v375 = vsel %vm349, %v326, 0
      %v378 = vsel %vm349, %v327, 0
      %v381 = vsel %vm349, %v328, 0
      %v384 = vsel %vm349, %v329, 0
      %v387 = vsel %vm349, %v330, 0
      %v390 = vsel %vm349, %v331, 0
      %v393 = vsel %vm349, %v332, 0
      %v396 = vsel %vm349, %v333, 0
      %vm398 = vcmask 1041408
      %v400 = vsel %vm398, %v346, 0
      %402 = vmatpush.bf16.msra.mxu0 0
      %403 = vmatpush.bf16.msra.mxu0 0
      %404 = vmatpush.bf16.msra.mxu0 0
      %405 = vmatpush.bf16.msra.mxu0 0
      %406 = vmatpush.bf16.msra.mxu0 0
      %407 = vmatpush.bf16.msra.mxu0 %v400
      %408 = vmatpush.bf16.msra.mxu0 %v345
      %409 = vmatpush.bf16.msra.mxu0 %v344
      %410 = vmatmul.bf16.gmra.mxu0 %v351
      %v411 = vpop.f32.mrf.mxu0
      %v412 = vadd.f32 %v252, %v411
      %v413 = vpop.f32.mrf.mxu0
      %v414 = vadd.f32 %v252, %v413
      %415 = vmatmul.bf16.gmra.mxu0 %v354
      %v416 = vpop.f32.mrf.mxu0
      %v417 = vadd.f32 %v252, %v416
      %v418 = vpop.f32.mrf.mxu0
      %v419 = vadd.f32 %v252, %v418
      %420 = vmatmul.bf16.gmra.mxu0 %v357
      %v421 = vpop.f32.mrf.mxu0
      %v422 = vadd.f32 %v252, %v421
      %v423 = vpop.f32.mrf.mxu0
      %v424 = vadd.f32 %v252, %v423
      %425 = vmatmul.bf16.gmra.mxu0 %v360
      %v426 = vpop.f32.mrf.mxu0
      %v427 = vadd.f32 %v252, %v426
      %v428 = vpop.f32.mrf.mxu0
      %v429 = vadd.f32 %v252, %v428
      %430 = vmatmul.bf16.gmra.mxu0 %v363
      %v431 = vpop.f32.mrf.mxu0
      %v432 = vadd.f32 %v252, %v431
      %v433 = vpop.f32.mrf.mxu0
      %v434 = vadd.f32 %v252, %v433
      %435 = vmatmul.bf16.gmra.mxu0 %v366
      %v436 = vpop.f32.mrf.mxu0
      %v437 = vadd.f32 %v252, %v436
      %v438 = vpop.f32.mrf.mxu0
      %v439 = vadd.f32 %v252, %v438
      %440 = vmatmul.bf16.gmra.mxu0 %v369
      %v441 = vpop.f32.mrf.mxu0
      %v442 = vadd.f32 %v252, %v441
      %v443 = vpop.f32.mrf.mxu0
      %v444 = vadd.f32 %v252, %v443
      %445 = vmatmul.bf16.gmra.mxu0 %v372
      %v446 = vpop.f32.mrf.mxu0
      %v447 = vadd.f32 %v252, %v446
      %v448 = vpop.f32.mrf.mxu0
      %v449 = vadd.f32 %v252, %v448
      %450 = vmatmul.bf16.gmra.mxu0 %v375
      %v451 = vpop.f32.mrf.mxu0
      %v452 = vadd.f32 %v252, %v451
      %v453 = vpop.f32.mrf.mxu0
      %v454 = vadd.f32 %v252, %v453
      %455 = vmatmul.bf16.gmra.mxu0 %v378
      %v456 = vpop.f32.mrf.mxu0
      %v457 = vadd.f32 %v252, %v456
      %v458 = vpop.f32.mrf.mxu0
      %v459 = vadd.f32 %v252, %v458
      %460 = vmatmul.bf16.gmra.mxu0 %v381
      %v461 = vpop.f32.mrf.mxu0
      %v462 = vadd.f32 %v252, %v461
      %v463 = vpop.f32.mrf.mxu0
      %v464 = vadd.f32 %v252, %v463
      %465 = vmatmul.bf16.gmra.mxu0 %v384
      %v466 = vpop.f32.mrf.mxu0
      %v467 = vadd.f32 %v252, %v466
      %v468 = vpop.f32.mrf.mxu0
      %v469 = vadd.f32 %v252, %v468
      %470 = vmatmul.bf16.gmra.mxu0 %v387
      %v471 = vpop.f32.mrf.mxu0
      %v472 = vadd.f32 %v252, %v471
      %v473 = vpop.f32.mrf.mxu0
      %v474 = vadd.f32 %v252, %v473
      %475 = vmatmul.bf16.gmra.mxu0 %v390
      %v476 = vpop.f32.mrf.mxu0
      %v477 = vadd.f32 %v252, %v476
      %v478 = vpop.f32.mrf.mxu0
      %v479 = vadd.f32 %v252, %v478
      %480 = vmatmul.bf16.gmra.mxu0 %v393
      %v481 = vpop.f32.mrf.mxu0
      %v482 = vadd.f32 %v252, %v481
      %v483 = vpop.f32.mrf.mxu0
      %v484 = vadd.f32 %v252, %v483
      %485 = vmatmul.bf16.gmra.mxu0 %v396
      %v486 = vpop.f32.mrf.mxu0
      %v487 = vadd.f32 %v252, %v486
      %v488 = vpop.f32.mrf.mxu0
      %v489 = vadd.f32 %v252, %v488
      %490 = vdwg.mxu0
      %491 = vst [vmem:[%s206] sm:$0xff] %v412
      %492 = vst [vmem:[%s206 + $0x8] sm:$0xff] %v414
      %493 = vst [vmem:[%s206 + $0x10] sm:$0xff] %v417
      %494 = vst [vmem:[%s206 + $0x18] sm:$0xff] %v419
      %495 = vst [vmem:[%s206 + $0x20] sm:$0xff] %v422
      %496 = vst [vmem:[%s206 + $0x28] sm:$0xff] %v424
      %497 = vst [vmem:[%s206 + $0x30] sm:$0xff] %v427
      %498 = vst [vmem:[%s206 + $0x38] sm:$0xff] %v429
      %499 = vst [vmem:[%s206 + $0x40] sm:$0xff] %v432
      %500 = vst [vmem:[%s206 + $0x48] sm:$0xff] %v434
      %501 = vst [vmem:[%s206 + $0x50] sm:$0xff] %v437
      %502 = vst [vmem:[%s206 + $0x58] sm:$0xff] %v439
      %503 = vst [vmem:[%s206 + $0x60] sm:$0xff] %v442
      %504 = vst [vmem:[%s206 + $0x68] sm:$0xff] %v444
      %505 = vst [vmem:[%s206 + $0x70] sm:$0xff] %v447
      %506 = vst [vmem:[%s206 + $0x78] sm:$0xff] %v449
      %507 = vst [vmem:[%s206 + $0x80] sm:$0xff] %v452
      %508 = vst [vmem:[%s206 + $0x88] sm:$0xff] %v454
      %509 = vst [vmem:[%s206 + $0x90] sm:$0xff] %v457
      %510 = vst [vmem:[%s206 + $0x98] sm:$0xff] %v459
      %511 = vst [vmem:[%s206 + $0xa0] sm:$0xff] %v462
      %512 = vst [vmem:[%s206 + $0xa8] sm:$0xff] %v464
      %513 = vst [vmem:[%s206 + $0xb0] sm:$0xff] %v467
      %514 = vst [vmem:[%s206 + $0xb8] sm:$0xff] %v469
      %515 = vst [vmem:[%s206 + $0xc0] sm:$0xff] %v472
      %516 = vst [vmem:[%s206 + $0xc8] sm:$0xff] %v474
      %517 = vst [vmem:[%s206 + $0xd0] sm:$0xff] %v477
      %518 = vst [vmem:[%s206 + $0xd8] sm:$0xff] %v479
      %519 = vst [vmem:[%s206 + $0xe0] sm:$0xff] %v482
      %520 = vst [vmem:[%s206 + $0xe8] sm:$0xff] %v484
      %521 = vst [vmem:[%s206 + $0xf0] sm:$0xff] %v487
      %522 = vst [vmem:[%s206 + $0xf8] sm:$0xff] %v489
      %v523 = vlaneseq
      %v524 = vshrl.u32 %v523, 7
      %v525 = vadd.s32 %v524, 8
      %v526 = vadd.s32 %v524, 16
      %v527 = vadd.s32 %v524, 24
      %v528 = vadd.s32 %v524, 32
      %v529 = vadd.s32 %v524, 40
      %v530 = vadd.s32 %v524, 48
      %v531 = vadd.s32 %v524, 56
      %v532 = vadd.s32 %v524, 64
      %v533 = vadd.s32 %v524, 72
      %v534 = vadd.s32 %v524, 80
      %v535 = vadd.s32 %v524, 88
      %v536 = vadd.s32 %v524, 96
      %v537 = vadd.s32 %v524, 104
      %v538 = vadd.s32 %v524, 112
      %v539 = vadd.s32 %v524, 120
      %v540 = vadd.s32 %v524, 128
      %v541 = vadd.s32 %v524, 136
      %v542 = vadd.s32 %v524, 144
      %v543 = vadd.s32 %v524, 152
      %v544 = vadd.s32 %v524, 160
      %v545 = vadd.s32 %v524, 168
      %v546 = vadd.s32 %v524, 176
      %v547 = vadd.s32 %v524, 184
      %v548 = vadd.s32 %v524, 192
      %v549 = vadd.s32 %v524, 200
      %v550 = vadd.s32 %v524, 208
      %v551 = vadd.s32 %v524, 216
      %v552 = vadd.s32 %v524, 224
      %v553 = vadd.s32 %v524, 232
      %v554 = vadd.s32 %v524, 240
      %v555 = vadd.s32 %v524, 248
      %s556 = smul.u32 %s16, 256
      %v557 = vstv %s556
      %v558 = vadd.s32 %v524, %v557
      %v559 = vadd.s32 %v525, %v557
      %v560 = vadd.s32 %v526, %v557
      %v561 = vadd.s32 %v527, %v557
      %v562 = vadd.s32 %v528, %v557
      %v563 = vadd.s32 %v529, %v557
      %v564 = vadd.s32 %v530, %v557
      %v565 = vadd.s32 %v531, %v557
      %v566 = vadd.s32 %v532, %v557
      %v567 = vadd.s32 %v533, %v557
      %v568 = vadd.s32 %v534, %v557
      %v569 = vadd.s32 %v535, %v557
      %v570 = vadd.s32 %v536, %v557
      %v571 = vadd.s32 %v537, %v557
      %v572 = vadd.s32 %v538, %v557
      %v573 = vadd.s32 %v539, %v557
      %v574 = vadd.s32 %v540, %v557
      %v575 = vadd.s32 %v541, %v557
      %v576 = vadd.s32 %v542, %v557
      %v577 = vadd.s32 %v543, %v557
      %v578 = vadd.s32 %v544, %v557
      %v579 = vadd.s32 %v545, %v557
      %v580 = vadd.s32 %v546, %v557
      %v581 = vadd.s32 %v547, %v557
      %v582 = vadd.s32 %v548, %v557
      %v583 = vadd.s32 %v549, %v557
      %v584 = vadd.s32 %v550, %v557
      %v585 = vadd.s32 %v551, %v557
      %v586 = vadd.s32 %v552, %v557
      %v587 = vadd.s32 %v553, %v557
      %v588 = vadd.s32 %v554, %v557
      %v589 = vadd.s32 %v555, %v557
      %vm590 = vcmp.lt.s32.totalorder %v558, 512
      %vm591 = vcmp.lt.s32.totalorder %v559, 512
      %vm592 = vcmp.lt.s32.totalorder %v560, 512
      %vm593 = vcmp.lt.s32.totalorder %v561, 512
      %vm594 = vcmp.lt.s32.totalorder %v562, 512
      %vm595 = vcmp.lt.s32.totalorder %v563, 512
      %vm596 = vcmp.lt.s32.totalorder %v564, 512
      %vm597 = vcmp.lt.s32.totalorder %v565, 512
      %vm598 = vcmp.lt.s32.totalorder %v566, 512
      %vm599 = vcmp.lt.s32.totalorder %v567, 512
      %vm600 = vcmp.lt.s32.totalorder %v568, 512
      %vm601 = vcmp.lt.s32.totalorder %v569, 512
      %vm602 = vcmp.lt.s32.totalorder %v570, 512
      %vm603 = vcmp.lt.s32.totalorder %v571, 512
      %vm604 = vcmp.lt.s32.totalorder %v572, 512
      %vm605 = vcmp.lt.s32.totalorder %v573, 512
      %vm606 = vcmp.lt.s32.totalorder %v574, 512
      %vm607 = vcmp.lt.s32.totalorder %v575, 512
      %vm608 = vcmp.lt.s32.totalorder %v576, 512
      %vm609 = vcmp.lt.s32.totalorder %v577, 512
      %vm610 = vcmp.lt.s32.totalorder %v578, 512
      %vm611 = vcmp.lt.s32.totalorder %v579, 512
      %vm612 = vcmp.lt.s32.totalorder %v580, 512
      %vm613 = vcmp.lt.s32.totalorder %v581, 512
      %vm614 = vcmp.lt.s32.totalorder %v582, 512
      %vm615 = vcmp.lt.s32.totalorder %v583, 512
      %vm616 = vcmp.lt.s32.totalorder %v584, 512
      %vm617 = vcmp.lt.s32.totalorder %v585, 512
      %vm618 = vcmp.lt.s32.totalorder %v586, 512
      %vm619 = vcmp.lt.s32.totalorder %v587, 512
      %vm620 = vcmp.lt.s32.totalorder %v588, 512
      %vm621 = vcmp.lt.s32.totalorder %v589, 512
      %v622 = vsel %vm590, 1, 0
      %v623 = vsel %vm591, 1, 0
      %v624 = vsel %vm592, 1, 0
      %v625 = vsel %vm593, 1, 0
      %v626 = vsel %vm594, 1, 0
      %v627 = vsel %vm595, 1, 0
      %v628 = vsel %vm596, 1, 0
      %v629 = vsel %vm597, 1, 0
      %v630 = vsel %vm598, 1, 0
      %v631 = vsel %vm599, 1, 0
      %v632 = vsel %vm600, 1, 0
      %v633 = vsel %vm601, 1, 0
      %v634 = vsel %vm602, 1, 0
      %v635 = vsel %vm603, 1, 0
      %v636 = vsel %vm604, 1, 0
      %v637 = vsel %vm605, 1, 0
      %v638 = vsel %vm606, 1, 0
      %v639 = vsel %vm607, 1, 0
      %v640 = vsel %vm608, 1, 0
      %v641 = vsel %vm609, 1, 0
      %v642 = vsel %vm610, 1, 0
      %v643 = vsel %vm611, 1, 0
      %v644 = vsel %vm612, 1, 0
      %v645 = vsel %vm613, 1, 0
      %v646 = vsel %vm614, 1, 0
      %v647 = vsel %vm615, 1, 0
      %v648 = vsel %vm616, 1, 0
      %v649 = vsel %vm617, 1, 0
      %v650 = vsel %vm618, 1, 0
      %v651 = vsel %vm619, 1, 0
      %v652 = vsel %vm620, 1, 0
      %v653 = vsel %vm621, 1, 0
      %v654 = vcvt.s32.f32 %v622
      %v655 = vcvt.s32.f32 %v623
      %v656 = vcvt.s32.f32 %v624
      %v657 = vcvt.s32.f32 %v625
      %v658 = vcvt.s32.f32 %v626
      %v659 = vcvt.s32.f32 %v627
      %v660 = vcvt.s32.f32 %v628
      %v661 = vcvt.s32.f32 %v629
      %v662 = vcvt.s32.f32 %v630
      %v663 = vcvt.s32.f32 %v631
      %v664 = vcvt.s32.f32 %v632
      %v665 = vcvt.s32.f32 %v633
      %v666 = vcvt.s32.f32 %v634
      %v667 = vcvt.s32.f32 %v635
      %v668 = vcvt.s32.f32 %v636
      %v669 = vcvt.s32.f32 %v637
      %v670 = vcvt.s32.f32 %v638
      %v671 = vcvt.s32.f32 %v639
      %v672 = vcvt.s32.f32 %v640
      %v673 = vcvt.s32.f32 %v641
      %v674 = vcvt.s32.f32 %v642
      %v675 = vcvt.s32.f32 %v643
      %v676 = vcvt.s32.f32 %v644
      %v677 = vcvt.s32.f32 %v645
      %v678 = vcvt.s32.f32 %v646
      %v679 = vcvt.s32.f32 %v647
      %v680 = vcvt.s32.f32 %v648
      %v681 = vcvt.s32.f32 %v649
      %v682 = vcvt.s32.f32 %v650
      %v683 = vcvt.s32.f32 %v651
      %v684 = vcvt.s32.f32 %v652
      %v685 = vcvt.s32.f32 %v653
      %v686 = vmul.f32 %v412, %v654
      %v687 = vmul.f32 %v414, %v655
      %v688 = vmul.f32 %v417, %v656
      %v689 = vmul.f32 %v419, %v657
      %v690 = vmul.f32 %v422, %v658
      %v691 = vmul.f32 %v424, %v659
      %v692 = vmul.f32 %v427, %v660
      %v693 = vmul.f32 %v429, %v661
      %v694 = vmul.f32 %v432, %v662
      %v695 = vmul.f32 %v434, %v663
      %v696 = vmul.f32 %v437, %v664
      %v697 = vmul.f32 %v439, %v665
      %v698 = vmul.f32 %v442, %v666
      %v699 = vmul.f32 %v444, %v667
      %v700 = vmul.f32 %v447, %v668
      %v701 = vmul.f32 %v449, %v669
      %v702 = vmul.f32 %v452, %v670
      %v703 = vmul.f32 %v454, %v671
      %v704 = vmul.f32 %v457, %v672
      %v705 = vmul.f32 %v459, %v673
      %v706 = vmul.f32 %v462, %v674
      %v707 = vmul.f32 %v464, %v675
      %v708 = vmul.f32 %v467, %v676
      %v709 = vmul.f32 %v469, %v677
      %v710 = vmul.f32 %v472, %v678
      %v711 = vmul.f32 %v474, %v679
      %v712 = vmul.f32 %v477, %v680
      %v713 = vmul.f32 %v479, %v681
      %v714 = vmul.f32 %v482, %v682
      %v715 = vmul.f32 %v484, %v683
      %v716 = vmul.f32 %v487, %v684
      %v717 = vmul.f32 %v489, %v685
      %v718 = vadd.f32 %v686, %v687
      %v719 = vadd.f32 %v718, %v688
      %v720 = vadd.f32 %v719, %v689
      %v721 = vadd.f32 %v720, %v690
      %v722 = vadd.f32 %v721, %v691
      %v723 = vadd.f32 %v722, %v692
      %v724 = vadd.f32 %v723, %v693
      %v725 = vadd.f32 %v724, %v694
      %v726 = vadd.f32 %v725, %v695
      %v727 = vadd.f32 %v726, %v696
      %v728 = vadd.f32 %v727, %v697
      %v729 = vadd.f32 %v728, %v698
      %v730 = vadd.f32 %v729, %v699
      %v731 = vadd.f32 %v730, %v700
      %v732 = vadd.f32 %v731, %v701
      %v733 = vadd.f32 %v732, %v702
      %v734 = vadd.f32 %v733, %v703
      %v735 = vadd.f32 %v734, %v704
      %v736 = vadd.f32 %v735, %v705
      %v737 = vadd.f32 %v736, %v706
      %v738 = vadd.f32 %v737, %v707
      %v739 = vadd.f32 %v738, %v708
      %v740 = vadd.f32 %v739, %v709
      %v741 = vadd.f32 %v740, %v710
      %v742 = vadd.f32 %v741, %v711
      %v743 = vadd.f32 %v742, %v712
      %v744 = vadd.f32 %v743, %v713
      %v745 = vadd.f32 %v744, %v714
      %v746 = vadd.f32 %v745, %v715
      %v747 = vadd.f32 %v746, %v716
      %v748 = vadd.f32 %v747, %v717
      %v749 = vrot.slane %v748, 4
      %v750 = vadd.f32 %v748, %v749
      %v751 = vrot.slane %v750, 2
      %v752 = vadd.f32 %v750, %v751
      %v753 = vrot.slane %v752, 1
      %v754 = vadd.f32 %v752, %v753
      %v755 = vmul.f32 %v686, %v412
      %v756 = vmul.f32 %v687, %v414
      %v757 = vmul.f32 %v688, %v417
      %v758 = vmul.f32 %v689, %v419
      %v759 = vmul.f32 %v690, %v422
      %v760 = vmul.f32 %v691, %v424
      %v761 = vmul.f32 %v692, %v427
      %v762 = vmul.f32 %v693, %v429
      %v763 = vmul.f32 %v694, %v432
      %v764 = vmul.f32 %v695, %v434
      %v765 = vmul.f32 %v696, %v437
      %v766 = vmul.f32 %v697, %v439
      %v767 = vmul.f32 %v698, %v442
      %v768 = vmul.f32 %v699, %v444
      %v769 = vmul.f32 %v700, %v447
      %v770 = vmul.f32 %v701, %v449
      %v771 = vmul.f32 %v702, %v452
      %v772 = vmul.f32 %v703, %v454
      %v773 = vmul.f32 %v704, %v457
      %v774 = vmul.f32 %v705, %v459
      %v775 = vmul.f32 %v706, %v462
      %v776 = vmul.f32 %v707, %v464
      %v777 = vmul.f32 %v708, %v467
      %v778 = vmul.f32 %v709, %v469
      %v779 = vmul.f32 %v710, %v472
      %v780 = vmul.f32 %v711, %v474
      %v781 = vmul.f32 %v712, %v477
      %v782 = vmul.f32 %v713, %v479
      %v783 = vmul.f32 %v714, %v482
      %v784 = vmul.f32 %v715, %v484
      %v785 = vmul.f32 %v716, %v487
      %v786 = vmul.f32 %v717, %v489
      %v787 = vadd.f32 %v755, %v756
      %v788 = vadd.f32 %v787, %v757
      %v789 = vadd.f32 %v788, %v758
      %v790 = vadd.f32 %v789, %v759
      %v791 = vadd.f32 %v790, %v760
      %v792 = vadd.f32 %v791, %v761
      %v793 = vadd.f32 %v792, %v762
      %v794 = vadd.f32 %v793, %v763
      %v795 = vadd.f32 %v794, %v764
      %v796 = vadd.f32 %v795, %v765
      %v797 = vadd.f32 %v796, %v766
      %v798 = vadd.f32 %v797, %v767
      %v799 = vadd.f32 %v798, %v768
      %v800 = vadd.f32 %v799, %v769
      %v801 = vadd.f32 %v800, %v770
      %v802 = vadd.f32 %v801, %v771
      %v803 = vadd.f32 %v802, %v772
      %v804 = vadd.f32 %v803, %v773
      %v805 = vadd.f32 %v804, %v774
      %v806 = vadd.f32 %v805, %v775
      %v807 = vadd.f32 %v806, %v776
      %v808 = vadd.f32 %v807, %v777
      %v809 = vadd.f32 %v808, %v778
      %v810 = vadd.f32 %v809, %v779
      %v811 = vadd.f32 %v810, %v780
      %v812 = vadd.f32 %v811, %v781
      %v813 = vadd.f32 %v812, %v782
      %v814 = vadd.f32 %v813, %v783
      %v815 = vadd.f32 %v814, %v784
      %v816 = vadd.f32 %v815, %v785
      %v817 = vadd.f32 %v816, %v786
      %v818 = vrot.slane %v817, 4
      %v819 = vadd.f32 %v817, %v818
      %v820 = vrot.slane %v819, 2
      %v821 = vadd.f32 %v819, %v820
      %v822 = vrot.slane %v821, 1
      %v823 = vadd.f32 %v821, %v822
      %vm824 = vcmask 1040384
      %v825 = vsel %vm824, %v754, %v823
      %v826 = vsel %vm398, %v825, 0.0
      %827 = vst [vmem:[%s211] sm:$0xff] %v826
      %s828 = smul.u32 32, %s16
      %p829 = scmp.lt.s32.totalorder %s828, 63
      %s830 = scalar_select %p829, %s828, 63
      %s831 = smul.addr %s830, 8
      %s832 = scalar_lea.vmem %s3, %s831
      %p833 = scmp.lt.s32.totalorder %s16, 1
      %s834 = scalar_select %p833, %s16, 1
      %s835 = smul.addr %s834, 8
      %s836 = scalar_lea.vmem %s4, %s835
      // Predicated region
      $region33: #{double_conv.4} parent=31 // pred_check
        %p837 = pneg %p102
      $region34: #{double_conv.4} parent=31 // pred_check_branch
        %839 = sbr.rel (%p837) target = $region36
      $region35: #{double_conv.4} parent=31 // pred_region
        %s840 = smul.u32 32, %s16
      $region36: #{double_conv.4} parent=31 // pred_fallthru
        _
      // Predicated region
      $region37: #{double_conv.4} parent=31 // pred_check
        %p841 = pneg %p128
      $region38: #{double_conv.4} parent=31 // pred_check_branch
        %843 = sbr.rel (%p841) target = $region40
      $region39: #{double_conv.4} parent=31 // pred_region
        _
      $region40: #{double_conv.4} parent=31 // pred_fallthru
        _
    $region32: #{double_conv.4} parent=5 // pred_fallthru
      _
    %p844 = scmp.le.s32.totalorder 2, %s11
    // Predicated region
    $region41: #{double_conv.4} parent=5 // pred_check
      %p845 = pneg %p844
    $region42: #{double_conv.4} parent=5 // pred_check_branch
      %847 = sbr.rel (%p845) target = $region44
    $region43: #{double_conv.4} parent=5 // pred_region
      %s848 = ssub.s32 %s11, 2
      // Predicated region
      $region45: #{double_conv.4} parent=43 // pred_check
        %p849 = pneg %p108
      $region46: #{double_conv.4} parent=43 // pred_check_branch
        %851 = sbr.rel (%p849) target = $region48
      $region47: #{double_conv.4} parent=43 // pred_region
        %s852 = smul.u32 32, %s17
        %p853 = scmp.lt.s32.totalorder %s852, 63
        %s854 = scalar_select %p853, %s852, 63
        %s855 = smul.addr %s854, 8
        %s856 = scalar_lea.vmem %s3, %s855
      $region48: #{double_conv.4} parent=43 // pred_fallthru
        _
      // Predicated region
      $region49: #{double_conv.4} parent=43 // pred_check
        %p857 = pneg %p134
      $region50: #{double_conv.4} parent=43 // pred_check_branch
        %859 = sbr.rel (%p857) target = $region52
      $region51: #{double_conv.4} parent=43 // pred_region
        %p860 = scmp.lt.s32.totalorder %s17, 1
        %s861 = scalar_select %p860, %s17, 1
        %s862 = smul.addr %s861, 8
        %s863 = scalar_lea.vmem %s4, %s862
      $region52: #{double_conv.4} parent=43 // pred_fallthru
        _
    $region44: #{double_conv.4} parent=5 // pred_fallthru
      _
  $region6: #{double_conv.4} parent=0 // loop_footer
    %s15 = sadd.s32 1, %s11
  $region7: #{double_conv.4} parent=0 // loop_footer_branch
    %10 = sbr.rel target = $region3
  $region8: #{double_conv.4} parent=0 // loop_exit
    _

// kernel: double_conv.6
$region0: #{double_conv.6}
  #allocation0 [shape = 'u32[]', space=smem, size = 0x4, offset = 0x4, fixed_abs, tag = 'smem constant byte address 0x4 - core index']
  #allocation1 [shape = 'u32[72,128]{1,0:T(1,128)}', space=vmem, size = 0x9000, scoped, tag = 'internal scratch']
  %s0 = inlined_call_operand.vmem [shape: bf16[512,72], index: 0, kind: input, shape index: {}]
  %s1 = inlined_call_operand.vmem [shape: bf16[72,128], index: 1, kind: input, shape index: {}]
  %s2 = inlined_call_operand.vmem [shape: f32[1,128], index: 2, kind: input, shape index: {}]
  %s3 = inlined_call_operand.vmem [shape: f32[512,128], index: 3, kind: output, shape index: {0}]
  %s4 = inlined_call_operand.vmem [shape: f32[2,8,128], index: 4, kind: output, shape index: {1}]
  %5 = xla_tuple %s3, %s4
  %s6 = sld [smem:[#allocation0]]
  $region53: #{double_conv.6} parent=0
    _
  %s8 = ssub.s32 1, %s6
  %s9 = scalar_select 0, %s8, %s6
  loop: start=0, step=1, limit=4
  $region2: #{double_conv.6} parent=0 // loop_pre_header
    _
  $region3: #{double_conv.6} parent=0 // loop_header
    %s11 = sphi 0, %s15
    %p12 = scmp.ge.s32.totalorder %s11, 4
    %s21 = sphi 0, %s23
    %s24 = sphi 0, %s21
    %s25 = sphi 0, %s24
    %s41 = sphi 0, %s25
    %s45 = sphi 0, %s45
    %s47 = sphi 0, %s45
    %s48 = sphi 0, %s47
    %s62 = sphi 0, %s48
    %s66 = sphi 0, %s66
    %s68 = sphi 0, %s66
    %s69 = sphi 0, %s68
    %s83 = sphi 0, %s69
    %s89 = sphi 0, %s91
    %s92 = sphi 0, %s89
    %s93 = sphi 0, %s92
    %s109 = sphi 0, %s93
    %s115 = sphi 0, %s117
    %s118 = sphi 0, %s115
    %s119 = sphi 0, %s118
    %s135 = sphi 0, %s119
  $region4: #{double_conv.6} parent=0 // loop_header_branch
    %14 = sbr.rel (%p12) target = $region8
  $region5: #{double_conv.6} parent=0 // loop_body
    %s16 = ssub.s32 %s11, 1
    %s17 = ssub.s32 %s11, 2
    %s18 = sadd.s32 %s11, 1
    %s19 = ssub.s32 %s11, %s18
    %p20 = scmp.eq.s32.totalorder %s19, 0
    %s22 = sadd.s32 %s21, 1
    %s23 = scalar_select %p20, %s21, %s22
    %p26 = pneg %p20
    %p27 = scmp.eq.s32.totalorder %s11, 1
    %p28 = por %p26, %p27
    %p29 = scmp.ne.s32.totalorder %s21, %s24
    %p30 = scmp.eq.s32.totalorder %s11, 0
    %p31 = por %p29, %p30
    %p32 = scmp.ne.s32.totalorder %s21, %s24
    %p33 = scmp.eq.s32.totalorder %s16, 1
    %p34 = por %p32, %p33
    %p35 = scmp.ne.s32.totalorder %s24, %s25
    %p36 = scmp.eq.s32.totalorder %s16, 0
    %p37 = por %p35, %p36
    %p38 = scmp.ne.s32.totalorder %s24, %s25
    %p39 = scmp.eq.s32.totalorder %s17, 1
    %p40 = por %p38, %p39
    %p42 = scmp.ne.s32.totalorder %s25, %s41
    %p43 = scmp.eq.s32.totalorder %s17, 0
    %p44 = por %p42, %p43
    %s46 = sadd.s32 %s45, 1
    %p49 = scmp.eq.s32.totalorder %s11, 1
    %p50 = scmp.ne.s32.totalorder %s45, %s47
    %p51 = scmp.eq.s32.totalorder %s11, 0
    %p52 = por %p50, %p51
    %p53 = scmp.ne.s32.totalorder %s45, %s47
    %p54 = scmp.eq.s32.totalorder %s16, 1
    %p55 = por %p53, %p54
    %p56 = scmp.ne.s32.totalorder %s47, %s48
    %p57 = scmp.eq.s32.totalorder %s16, 0
    %p58 = por %p56, %p57
    %p59 = scmp.ne.s32.totalorder %s47, %s48
    %p60 = scmp.eq.s32.totalorder %s17, 1
    %p61 = por %p59, %p60
    %p63 = scmp.ne.s32.totalorder %s48, %s62
    %p64 = scmp.eq.s32.totalorder %s17, 0
    %p65 = por %p63, %p64
    %s67 = sadd.s32 %s66, 1
    %p70 = scmp.eq.s32.totalorder %s11, 1
    %p71 = scmp.ne.s32.totalorder %s66, %s68
    %p72 = scmp.eq.s32.totalorder %s11, 0
    %p73 = por %p71, %p72
    %p74 = scmp.ne.s32.totalorder %s66, %s68
    %p75 = scmp.eq.s32.totalorder %s16, 1
    %p76 = por %p74, %p75
    %p77 = scmp.ne.s32.totalorder %s68, %s69
    %p78 = scmp.eq.s32.totalorder %s16, 0
    %p79 = por %p77, %p78
    %p80 = scmp.ne.s32.totalorder %s68, %s69
    %p81 = scmp.eq.s32.totalorder %s17, 1
    %p82 = por %p80, %p81
    %p84 = scmp.ne.s32.totalorder %s69, %s83
    %p85 = scmp.eq.s32.totalorder %s17, 0
    %p86 = por %p84, %p85
    %s87 = ssub.s32 %s11, %s18
    %p88 = scmp.eq.s32.totalorder %s87, 0
    %s90 = sadd.s32 %s89, 1
    %s91 = scalar_select %p88, %s89, %s90
    %p94 = pneg %p88
    %p95 = scmp.eq.s32.totalorder %s11, 1
    %p96 = por %p94, %p95
    %p97 = scmp.ne.s32.totalorder %s89, %s92
    %p98 = scmp.eq.s32.totalorder %s11, 0
    %p99 = por %p97, %p98
    %p100 = scmp.ne.s32.totalorder %s89, %s92
    %p101 = scmp.eq.s32.totalorder %s16, 1
    %p102 = por %p100, %p101
    %p103 = scmp.ne.s32.totalorder %s92, %s93
    %p104 = scmp.eq.s32.totalorder %s16, 0
    %p105 = por %p103, %p104
    %p106 = scmp.ne.s32.totalorder %s92, %s93
    %p107 = scmp.eq.s32.totalorder %s17, 1
    %p108 = por %p106, %p107
    %p110 = scmp.ne.s32.totalorder %s93, %s109
    %p111 = scmp.eq.s32.totalorder %s17, 0
    %p112 = por %p110, %p111
    %s113 = ssub.s32 %s11, %s18
    %p114 = scmp.eq.s32.totalorder %s113, 0
    %s116 = sadd.s32 %s115, 1
    %s117 = scalar_select %p114, %s115, %s116
    %p120 = pneg %p114
    %p121 = scmp.eq.s32.totalorder %s11, 1
    %p122 = por %p120, %p121
    %p123 = scmp.ne.s32.totalorder %s115, %s118
    %p124 = scmp.eq.s32.totalorder %s11, 0
    %p125 = por %p123, %p124
    %p126 = scmp.ne.s32.totalorder %s115, %s118
    %p127 = scmp.eq.s32.totalorder %s16, 1
    %p128 = por %p126, %p127
    %p129 = scmp.ne.s32.totalorder %s118, %s119
    %p130 = scmp.eq.s32.totalorder %s16, 0
    %p131 = por %p129, %p130
    %p132 = scmp.ne.s32.totalorder %s118, %s119
    %p133 = scmp.eq.s32.totalorder %s17, 1
    %p134 = por %p132, %p133
    %p136 = scmp.ne.s32.totalorder %s119, %s135
    %p137 = scmp.eq.s32.totalorder %s17, 0
    %p138 = por %p136, %p137
    %p139 = scmp.le.s32.totalorder 1, %s11
    %p140 = scmp.lt.s32.totalorder %s11, 3
    %p141 = pnand %p139, %p140
    %p142 = pneg %p141
    // Predicated region
    $region9: #{double_conv.6} parent=5 // pred_check
      _
    $region10: #{double_conv.6} parent=5 // pred_check_branch
      %144 = sbr.rel (%p141) target = $region12
    $region11: #{double_conv.6} parent=5 // pred_region
      %s145 = ssub.s32 %s11, 1
      // Predicated region
      $region13: #{double_conv.6} parent=11 // pred_check
        %p146 = pneg %p58
      $region14: #{double_conv.6} parent=11 // pred_check_branch
        %148 = sbr.rel (%p146) target = $region16
      $region15: #{double_conv.6} parent=11 // pred_region
        _
      $region16: #{double_conv.6} parent=11 // pred_fallthru
        _
      // Predicated region
      $region17: #{double_conv.6} parent=11 // pred_check
        %p149 = pneg %p79
      $region18: #{double_conv.6} parent=11 // pred_check_branch
        %151 = sbr.rel (%p149) target = $region20
      $region19: #{double_conv.6} parent=11 // pred_region
        _
      $region20: #{double_conv.6} parent=11 // pred_fallthru
        _
    $region12: #{double_conv.6} parent=5 // pred_fallthru
      _
    %p152 = scmp.lt.s32.totalorder %s11, 2
    // Predicated region
    $region21: #{double_conv.6} parent=5 // pred_check
      %p153 = pneg %p152
    $region22: #{double_conv.6} parent=5 // pred_check_branch
      %155 = sbr.rel (%p153) target = $region24
    $region23: #{double_conv.6} parent=5 // pred_region
      // Predicated region
      $region25: #{double_conv.6} parent=23 // pred_check
        %p156 = pneg %p31
      $region26: #{double_conv.6} parent=23 // pred_check_branch
        %158 = sbr.rel (%p156) target = $region28
      $region27: #{double_conv.6} parent=23 // pred_region
        %s159 = smul.u32 32, %s11
        %p160 = scmp.lt.s32.totalorder %s159, 63
        %s161 = scalar_select %p160, %s159, 63
        %s162 = smul.addr %s161, 4
        %s163 = scalar_lea.vmem %s0, %s162
        %s164 = smul.u32 32, %s11
      $region28: #{double_conv.6} parent=23 // pred_fallthru
        _
    $region24: #{double_conv.6} parent=5 // pred_fallthru
      _
    %p165 = scmp.le.s32.totalorder 1, %s11
    %p166 = scmp.lt.s32.totalorder %s11, 3
    %p167 = pnand %p165, %p166
    %p168 = pneg %p167
    // Predicated region
    $region29: #{double_conv.6} parent=5 // pred_check
      _
    $region30: #{double_conv.6} parent=5 // pred_check_branch
      %170 = sbr.rel (%p167) target = $region32
    $region31: #{double_conv.6} parent=5 // pred_region
      %s171 = ssub.s32 %s11, 1
      %s172 = smul.u32 32, %s16
      %p173 = scmp.lt.s32.totalorder %s172, 63
      %s174 = scalar_select %p173, %s172, 63
      %s175 = smul.addr %s174, 4
      %s176 = scalar_lea.vmem %s0, %s175
      %p177 = pneg %p37
      %p178 = pneg %p34
      %p179 = pneg %p58
      %p180 = pneg %p55
      %p181 = pneg %p79
      %p182 = pneg %p76
      %p183 = pneg %p105
      %p184 = pneg %p102
      %s185 = smul.u32 32, %s16
      %p186 = scmp.lt.s32.totalorder %s185, 63
      %s187 = scalar_select %p186, %s185, 63
      %s188 = smul.addr %s187, 8
      %s189 = scalar_lea.vmem %s3, %s188
      %p190 = pneg %p131
      %p191 = pneg %p128
      %p192 = scmp.lt.s32.totalorder %s16, 1
      %s193 = scalar_select %p192, %s16, 1
      %s194 = smul.addr %s193, 8
      %s195 = scalar_lea.vmem %s4, %s194
      %s196 = smul.u32 32, %s16
      %p197 = scmp.lt.s32.totalorder %s196, 63
      %s198 = scalar_select %p197, %s196, 63
      %s199 = smul.addr %s198, 4
      %s200 = scalar_lea.vmem %s0, %s199
      %s201 = smul.u32 32, %s16
      %s202 = smul.u32 32, %s16
      %p203 = scmp.lt.s32.totalorder %s202, 63
      %s204 = scalar_select %p203, %s202, 63
      %s205 = smul.addr %s204, 8
      %s206 = scalar_lea.vmem %s3, %s205
      %s207 = smul.u32 32, %s16
      %p208 = scmp.lt.s32.totalorder %s16, 1
      %s209 = scalar_select %p208, %s16, 1
      %s210 = smul.addr %s209, 8
      %s211 = scalar_lea.vmem %s4, %s210
      %v213 = vld [vmem:[%s200] sm:$0xf]
      %v214 = vld [vmem:[%s200 + $0x4] sm:$0xf]
      %v215 = vld [vmem:[%s200 + $0x8] sm:$0xf]
      %v216 = vld [vmem:[%s200 + $0xc] sm:$0xf]
      %v217 = vld [vmem:[%s200 + $0x10] sm:$0xf]
      %v218 = vld [vmem:[%s200 + $0x14] sm:$0xf]
      %v219 = vld [vmem:[%s200 + $0x18] sm:$0xf]
      %v220 = vld [vmem:[%s200 + $0x1c] sm:$0xf]
      %v221 = vld [vmem:[%s200 + $0x20] sm:$0xf]
      %v222 = vld [vmem:[%s200 + $0x24] sm:$0xf]
      %v223 = vld [vmem:[%s200 + $0x28] sm:$0xf]
      %v224 = vld [vmem:[%s200 + $0x2c] sm:$0xf]
      %v225 = vld [vmem:[%s200 + $0x30] sm:$0xf]
      %v226 = vld [vmem:[%s200 + $0x34] sm:$0xf]
      %v227 = vld [vmem:[%s200 + $0x38] sm:$0xf]
      %v228 = vld [vmem:[%s200 + $0x3c] sm:$0xf]
      %v229 = vld [vmem:[%s200 + $0x40] sm:$0xf]
      %v230 = vld [vmem:[%s200 + $0x44] sm:$0xf]
      %v231 = vld [vmem:[%s200 + $0x48] sm:$0xf]
      %v232 = vld [vmem:[%s200 + $0x4c] sm:$0xf]
      %v233 = vld [vmem:[%s200 + $0x50] sm:$0xf]
      %v234 = vld [vmem:[%s200 + $0x54] sm:$0xf]
      %v235 = vld [vmem:[%s200 + $0x58] sm:$0xf]
      %v236 = vld [vmem:[%s200 + $0x5c] sm:$0xf]
      %v237 = vld [vmem:[%s200 + $0x60] sm:$0xf]
      %v238 = vld [vmem:[%s200 + $0x64] sm:$0xf]
      %v239 = vld [vmem:[%s200 + $0x68] sm:$0xf]
      %v240 = vld [vmem:[%s200 + $0x6c] sm:$0xf]
      %v241 = vld [vmem:[%s200 + $0x70] sm:$0xf]
      %v242 = vld [vmem:[%s200 + $0x74] sm:$0xf]
      %v243 = vld [vmem:[%s200 + $0x78] sm:$0xf]
      %v244 = vld [vmem:[%s200 + $0x7c] sm:$0xf]
      %v245 = vld [vmem:[%s1] sm:$0xf]
      %v246 = vld [vmem:[%s1 + $0x4] sm:$0xf]
      %v247 = vld [vmem:[%s1 + $0x8] sm:$0xf]
      %v248 = vld [vmem:[%s1 + $0xc] sm:$0xf]
      %v249 = vld [vmem:[%s1 + $0x10] sm:$0xf]
      %v250 = vld [vmem:[%s1 + $0x14] sm:$0xf]
      %v251 = vld [vmem:[%s1 + $0x18] sm:$0xf]
      %v252 = vld [vmem:[%s1 + $0x1c] sm:$0xf]
      %v253 = vld [vmem:[%s1 + $0x20] sm:$0xf]
      %v254 = vld [vmem:[%s2] sm:$0x1]
      %v256 = vperm.slane %v254, 0
      %v290 = vunpack.c.l.b16 %v213
      %v291 = vunpack.c.l.b16 %v214
      %v292 = vunpack.c.l.b16 %v215
      %v293 = vunpack.c.l.b16 %v216
      %v294 = vunpack.c.l.b16 %v217
      %v295 = vunpack.c.l.b16 %v218
      %v296 = vunpack.c.l.b16 %v219
      %v297 = vunpack.c.l.b16 %v220
      %v298 = vunpack.c.l.b16 %v221
      %v299 = vunpack.c.l.b16 %v222
      %v300 = vunpack.c.l.b16 %v223
      %v301 = vunpack.c.l.b16 %v224
      %v302 = vunpack.c.l.b16 %v225
      %v303 = vunpack.c.l.b16 %v226
      %v304 = vunpack.c.l.b16 %v227
      %v305 = vunpack.c.l.b16 %v228
      %v306 = vunpack.c.l.b16 %v229
      %v307 = vunpack.c.l.b16 %v230
      %v308 = vunpack.c.l.b16 %v231
      %v309 = vunpack.c.l.b16 %v232
      %v310 = vunpack.c.l.b16 %v233
      %v311 = vunpack.c.l.b16 %v234
      %v312 = vunpack.c.l.b16 %v235
      %v313 = vunpack.c.l.b16 %v236
      %v314 = vunpack.c.l.b16 %v237
      %v315 = vunpack.c.l.b16 %v238
      %v316 = vunpack.c.l.b16 %v239
      %v317 = vunpack.c.l.b16 %v240
      %v318 = vunpack.c.l.b16 %v241
      %v319 = vunpack.c.l.b16 %v242
      %v320 = vunpack.c.l.b16 %v243
      %v321 = vunpack.c.l.b16 %v244
      %v322 = vpack.c.b16 %v291, %v290
      %v323 = vpack.c.b16 %v293, %v292
      %v324 = vpack.c.b16 %v295, %v294
      %v325 = vpack.c.b16 %v297, %v296
      %v326 = vpack.c.b16 %v299, %v298
      %v327 = vpack.c.b16 %v301, %v300
      %v328 = vpack.c.b16 %v303, %v302
      %v329 = vpack.c.b16 %v305, %v304
      %v330 = vpack.c.b16 %v307, %v306
      %v331 = vpack.c.b16 %v309, %v308
      %v332 = vpack.c.b16 %v311, %v310
      %v333 = vpack.c.b16 %v313, %v312
      %v334 = vpack.c.b16 %v315, %v314
      %v335 = vpack.c.b16 %v317, %v316
      %v336 = vpack.c.b16 %v319, %v318
      %v337 = vpack.c.b16 %v321, %v320
      %v347 = vunpack.c.l.b16 %v245
      %v348 = vunpack.c.l.b16 %v246
      %v349 = vunpack.c.l.b16 %v247
      %v350 = vunpack.c.l.b16 %v248
      %v351 = vunpack.c.l.b16 %v249
      %v352 = vunpack.c.l.b16 %v250
      %v353 = vunpack.c.l.b16 %v251
      %v354 = vunpack.c.l.b16 %v252
      %v355 = vunpack.c.l.b16 %v253
      %v356 = vpack.c.b16 %v348, %v347
      %v357 = vpack.c.b16 %v350, %v349
      %v358 = vpack.c.b16 %v352, %v351
      %v359 = vpack.c.b16 %v354, %v353
      %v360 = vpack.c.b16 %v355, %v355
      %vm365 = vcmask 588800
      %v367 = vsel %vm365, %v322, 0
      %v370 = vsel %vm365, %v323, 0
      %v373 = vsel %vm365, %v324, 0
      %v376 = vsel %vm365, %v325, 0
      %v379 = vsel %vm365, %v326, 0
      %v382 = vsel %vm365, %v327, 0
      %v385 = vsel %vm365, %v328, 0
      %v388 = vsel %vm365, %v329, 0
      %v391 = vsel %vm365, %v330, 0
      %v394 = vsel %vm365, %v331, 0
      %v397 = vsel %vm365, %v332, 0
      %v400 = vsel %vm365, %v333, 0
      %v403 = vsel %vm365, %v334, 0
      %v406 = vsel %vm365, %v335, 0
      %v409 = vsel %vm365, %v336, 0
      %v412 = vsel %vm365, %v337, 0
      %vm414 = vcmask 1043456
      %v416 = vsel %vm414, %v360, 0
      %418 = vmatpush.bf16.msra.mxu0 0
      %419 = vmatpush.bf16.msra.mxu0 0
      %420 = vmatpush.bf16.msra.mxu0 0
      %421 = vmatpush.bf16.msra.mxu0 %v416
      %422 = vmatpush.bf16.msra.mxu0 %v359
      %423 = vmatpush.bf16.msra.mxu0 %v358
      %424 = vmatpush.bf16.msra.mxu0 %v357
      %425 = vmatpush.bf16.msra.mxu0 %v356
      %426 = vmatmul.bf16.gmra.mxu0 %v367
      %v427 = vpop.f32.mrf.mxu0
      %v428 = vadd.f32 %v256, %v427
      %v429 = vpop.f32.mrf.mxu0
      %v430 = vadd.f32 %v256, %v429
      %431 = vmatmul.bf16.gmra.mxu0 %v370
      %v432 = vpop.f32.mrf.mxu0
      %v433 = vadd.f32 %v256, %v432
      %v434 = vpop.f32.mrf.mxu0
      %v435 = vadd.f32 %v256, %v434
      %436 = vmatmul.bf16.gmra.mxu0 %v373
      %v437 = vpop.f32.mrf.mxu0
      %v438 = vadd.f32 %v256, %v437
      %v439 = vpop.f32.mrf.mxu0
      %v440 = vadd.f32 %v256, %v439
      %441 = vmatmul.bf16.gmra.mxu0 %v376
      %v442 = vpop.f32.mrf.mxu0
      %v443 = vadd.f32 %v256, %v442
      %v444 = vpop.f32.mrf.mxu0
      %v445 = vadd.f32 %v256, %v444
      %446 = vmatmul.bf16.gmra.mxu0 %v379
      %v447 = vpop.f32.mrf.mxu0
      %v448 = vadd.f32 %v256, %v447
      %v449 = vpop.f32.mrf.mxu0
      %v450 = vadd.f32 %v256, %v449
      %451 = vmatmul.bf16.gmra.mxu0 %v382
      %v452 = vpop.f32.mrf.mxu0
      %v453 = vadd.f32 %v256, %v452
      %v454 = vpop.f32.mrf.mxu0
      %v455 = vadd.f32 %v256, %v454
      %456 = vmatmul.bf16.gmra.mxu0 %v385
      %v457 = vpop.f32.mrf.mxu0
      %v458 = vadd.f32 %v256, %v457
      %v459 = vpop.f32.mrf.mxu0
      %v460 = vadd.f32 %v256, %v459
      %461 = vmatmul.bf16.gmra.mxu0 %v388
      %v462 = vpop.f32.mrf.mxu0
      %v463 = vadd.f32 %v256, %v462
      %v464 = vpop.f32.mrf.mxu0
      %v465 = vadd.f32 %v256, %v464
      %466 = vmatmul.bf16.gmra.mxu0 %v391
      %v467 = vpop.f32.mrf.mxu0
      %v468 = vadd.f32 %v256, %v467
      %v469 = vpop.f32.mrf.mxu0
      %v470 = vadd.f32 %v256, %v469
      %471 = vmatmul.bf16.gmra.mxu0 %v394
      %v472 = vpop.f32.mrf.mxu0
      %v473 = vadd.f32 %v256, %v472
      %v474 = vpop.f32.mrf.mxu0
      %v475 = vadd.f32 %v256, %v474
      %476 = vmatmul.bf16.gmra.mxu0 %v397
      %v477 = vpop.f32.mrf.mxu0
      %v478 = vadd.f32 %v256, %v477
      %v479 = vpop.f32.mrf.mxu0
      %v480 = vadd.f32 %v256, %v479
      %481 = vmatmul.bf16.gmra.mxu0 %v400
      %v482 = vpop.f32.mrf.mxu0
      %v483 = vadd.f32 %v256, %v482
      %v484 = vpop.f32.mrf.mxu0
      %v485 = vadd.f32 %v256, %v484
      %486 = vmatmul.bf16.gmra.mxu0 %v403
      %v487 = vpop.f32.mrf.mxu0
      %v488 = vadd.f32 %v256, %v487
      %v489 = vpop.f32.mrf.mxu0
      %v490 = vadd.f32 %v256, %v489
      %491 = vmatmul.bf16.gmra.mxu0 %v406
      %v492 = vpop.f32.mrf.mxu0
      %v493 = vadd.f32 %v256, %v492
      %v494 = vpop.f32.mrf.mxu0
      %v495 = vadd.f32 %v256, %v494
      %496 = vmatmul.bf16.gmra.mxu0 %v409
      %v497 = vpop.f32.mrf.mxu0
      %v498 = vadd.f32 %v256, %v497
      %v499 = vpop.f32.mrf.mxu0
      %v500 = vadd.f32 %v256, %v499
      %501 = vmatmul.bf16.gmra.mxu0 %v412
      %v502 = vpop.f32.mrf.mxu0
      %v503 = vadd.f32 %v256, %v502
      %v504 = vpop.f32.mrf.mxu0
      %v505 = vadd.f32 %v256, %v504
      %506 = vdwg.mxu0
      %507 = vst [vmem:[%s206] sm:$0xff] %v428
      %508 = vst [vmem:[%s206 + $0x8] sm:$0xff] %v430
      %509 = vst [vmem:[%s206 + $0x10] sm:$0xff] %v433
      %510 = vst [vmem:[%s206 + $0x18] sm:$0xff] %v435
      %511 = vst [vmem:[%s206 + $0x20] sm:$0xff] %v438
      %512 = vst [vmem:[%s206 + $0x28] sm:$0xff] %v440
      %513 = vst [vmem:[%s206 + $0x30] sm:$0xff] %v443
      %514 = vst [vmem:[%s206 + $0x38] sm:$0xff] %v445
      %515 = vst [vmem:[%s206 + $0x40] sm:$0xff] %v448
      %516 = vst [vmem:[%s206 + $0x48] sm:$0xff] %v450
      %517 = vst [vmem:[%s206 + $0x50] sm:$0xff] %v453
      %518 = vst [vmem:[%s206 + $0x58] sm:$0xff] %v455
      %519 = vst [vmem:[%s206 + $0x60] sm:$0xff] %v458
      %520 = vst [vmem:[%s206 + $0x68] sm:$0xff] %v460
      %521 = vst [vmem:[%s206 + $0x70] sm:$0xff] %v463
      %522 = vst [vmem:[%s206 + $0x78] sm:$0xff] %v465
      %523 = vst [vmem:[%s206 + $0x80] sm:$0xff] %v468
      %524 = vst [vmem:[%s206 + $0x88] sm:$0xff] %v470
      %525 = vst [vmem:[%s206 + $0x90] sm:$0xff] %v473
      %526 = vst [vmem:[%s206 + $0x98] sm:$0xff] %v475
      %527 = vst [vmem:[%s206 + $0xa0] sm:$0xff] %v478
      %528 = vst [vmem:[%s206 + $0xa8] sm:$0xff] %v480
      %529 = vst [vmem:[%s206 + $0xb0] sm:$0xff] %v483
      %530 = vst [vmem:[%s206 + $0xb8] sm:$0xff] %v485
      %531 = vst [vmem:[%s206 + $0xc0] sm:$0xff] %v488
      %532 = vst [vmem:[%s206 + $0xc8] sm:$0xff] %v490
      %533 = vst [vmem:[%s206 + $0xd0] sm:$0xff] %v493
      %534 = vst [vmem:[%s206 + $0xd8] sm:$0xff] %v495
      %535 = vst [vmem:[%s206 + $0xe0] sm:$0xff] %v498
      %536 = vst [vmem:[%s206 + $0xe8] sm:$0xff] %v500
      %537 = vst [vmem:[%s206 + $0xf0] sm:$0xff] %v503
      %538 = vst [vmem:[%s206 + $0xf8] sm:$0xff] %v505
      %v539 = vlaneseq
      %v540 = vshrl.u32 %v539, 7
      %v541 = vadd.s32 %v540, 8
      %v542 = vadd.s32 %v540, 16
      %v543 = vadd.s32 %v540, 24
      %v544 = vadd.s32 %v540, 32
      %v545 = vadd.s32 %v540, 40
      %v546 = vadd.s32 %v540, 48
      %v547 = vadd.s32 %v540, 56
      %v548 = vadd.s32 %v540, 64
      %v549 = vadd.s32 %v540, 72
      %v550 = vadd.s32 %v540, 80
      %v551 = vadd.s32 %v540, 88
      %v552 = vadd.s32 %v540, 96
      %v553 = vadd.s32 %v540, 104
      %v554 = vadd.s32 %v540, 112
      %v555 = vadd.s32 %v540, 120
      %v556 = vadd.s32 %v540, 128
      %v557 = vadd.s32 %v540, 136
      %v558 = vadd.s32 %v540, 144
      %v559 = vadd.s32 %v540, 152
      %v560 = vadd.s32 %v540, 160
      %v561 = vadd.s32 %v540, 168
      %v562 = vadd.s32 %v540, 176
      %v563 = vadd.s32 %v540, 184
      %v564 = vadd.s32 %v540, 192
      %v565 = vadd.s32 %v540, 200
      %v566 = vadd.s32 %v540, 208
      %v567 = vadd.s32 %v540, 216
      %v568 = vadd.s32 %v540, 224
      %v569 = vadd.s32 %v540, 232
      %v570 = vadd.s32 %v540, 240
      %v571 = vadd.s32 %v540, 248
      %s572 = smul.u32 %s16, 256
      %v573 = vstv %s572
      %v574 = vadd.s32 %v540, %v573
      %v575 = vadd.s32 %v541, %v573
      %v576 = vadd.s32 %v542, %v573
      %v577 = vadd.s32 %v543, %v573
      %v578 = vadd.s32 %v544, %v573
      %v579 = vadd.s32 %v545, %v573
      %v580 = vadd.s32 %v546, %v573
      %v581 = vadd.s32 %v547, %v573
      %v582 = vadd.s32 %v548, %v573
      %v583 = vadd.s32 %v549, %v573
      %v584 = vadd.s32 %v550, %v573
      %v585 = vadd.s32 %v551, %v573
      %v586 = vadd.s32 %v552, %v573
      %v587 = vadd.s32 %v553, %v573
      %v588 = vadd.s32 %v554, %v573
      %v589 = vadd.s32 %v555, %v573
      %v590 = vadd.s32 %v556, %v573
      %v591 = vadd.s32 %v557, %v573
      %v592 = vadd.s32 %v558, %v573
      %v593 = vadd.s32 %v559, %v573
      %v594 = vadd.s32 %v560, %v573
      %v595 = vadd.s32 %v561, %v573
      %v596 = vadd.s32 %v562, %v573
      %v597 = vadd.s32 %v563, %v573
      %v598 = vadd.s32 %v564, %v573
      %v599 = vadd.s32 %v565, %v573
      %v600 = vadd.s32 %v566, %v573
      %v601 = vadd.s32 %v567, %v573
      %v602 = vadd.s32 %v568, %v573
      %v603 = vadd.s32 %v569, %v573
      %v604 = vadd.s32 %v570, %v573
      %v605 = vadd.s32 %v571, %v573
      %vm606 = vcmp.lt.s32.totalorder %v574, 512
      %vm607 = vcmp.lt.s32.totalorder %v575, 512
      %vm608 = vcmp.lt.s32.totalorder %v576, 512
      %vm609 = vcmp.lt.s32.totalorder %v577, 512
      %vm610 = vcmp.lt.s32.totalorder %v578, 512
      %vm611 = vcmp.lt.s32.totalorder %v579, 512
      %vm612 = vcmp.lt.s32.totalorder %v580, 512
      %vm613 = vcmp.lt.s32.totalorder %v581, 512
      %vm614 = vcmp.lt.s32.totalorder %v582, 512
      %vm615 = vcmp.lt.s32.totalorder %v583, 512
      %vm616 = vcmp.lt.s32.totalorder %v584, 512
      %vm617 = vcmp.lt.s32.totalorder %v585, 512
      %vm618 = vcmp.lt.s32.totalorder %v586, 512
      %vm619 = vcmp.lt.s32.totalorder %v587, 512
      %vm620 = vcmp.lt.s32.totalorder %v588, 512
      %vm621 = vcmp.lt.s32.totalorder %v589, 512
      %vm622 = vcmp.lt.s32.totalorder %v590, 512
      %vm623 = vcmp.lt.s32.totalorder %v591, 512
      %vm624 = vcmp.lt.s32.totalorder %v592, 512
      %vm625 = vcmp.lt.s32.totalorder %v593, 512
      %vm626 = vcmp.lt.s32.totalorder %v594, 512
      %vm627 = vcmp.lt.s32.totalorder %v595, 512
      %vm628 = vcmp.lt.s32.totalorder %v596, 512
      %vm629 = vcmp.lt.s32.totalorder %v597, 512
      %vm630 = vcmp.lt.s32.totalorder %v598, 512
      %vm631 = vcmp.lt.s32.totalorder %v599, 512
      %vm632 = vcmp.lt.s32.totalorder %v600, 512
      %vm633 = vcmp.lt.s32.totalorder %v601, 512
      %vm634 = vcmp.lt.s32.totalorder %v602, 512
      %vm635 = vcmp.lt.s32.totalorder %v603, 512
      %vm636 = vcmp.lt.s32.totalorder %v604, 512
      %vm637 = vcmp.lt.s32.totalorder %v605, 512
      %v638 = vsel %vm606, 1, 0
      %v639 = vsel %vm607, 1, 0
      %v640 = vsel %vm608, 1, 0
      %v641 = vsel %vm609, 1, 0
      %v642 = vsel %vm610, 1, 0
      %v643 = vsel %vm611, 1, 0
      %v644 = vsel %vm612, 1, 0
      %v645 = vsel %vm613, 1, 0
      %v646 = vsel %vm614, 1, 0
      %v647 = vsel %vm615, 1, 0
      %v648 = vsel %vm616, 1, 0
      %v649 = vsel %vm617, 1, 0
      %v650 = vsel %vm618, 1, 0
      %v651 = vsel %vm619, 1, 0
      %v652 = vsel %vm620, 1, 0
      %v653 = vsel %vm621, 1, 0
      %v654 = vsel %vm622, 1, 0
      %v655 = vsel %vm623, 1, 0
      %v656 = vsel %vm624, 1, 0
      %v657 = vsel %vm625, 1, 0
      %v658 = vsel %vm626, 1, 0
      %v659 = vsel %vm627, 1, 0
      %v660 = vsel %vm628, 1, 0
      %v661 = vsel %vm629, 1, 0
      %v662 = vsel %vm630, 1, 0
      %v663 = vsel %vm631, 1, 0
      %v664 = vsel %vm632, 1, 0
      %v665 = vsel %vm633, 1, 0
      %v666 = vsel %vm634, 1, 0
      %v667 = vsel %vm635, 1, 0
      %v668 = vsel %vm636, 1, 0
      %v669 = vsel %vm637, 1, 0
      %v670 = vcvt.s32.f32 %v638
      %v671 = vcvt.s32.f32 %v639
      %v672 = vcvt.s32.f32 %v640
      %v673 = vcvt.s32.f32 %v641
      %v674 = vcvt.s32.f32 %v642
      %v675 = vcvt.s32.f32 %v643
      %v676 = vcvt.s32.f32 %v644
      %v677 = vcvt.s32.f32 %v645
      %v678 = vcvt.s32.f32 %v646
      %v679 = vcvt.s32.f32 %v647
      %v680 = vcvt.s32.f32 %v648
      %v681 = vcvt.s32.f32 %v649
      %v682 = vcvt.s32.f32 %v650
      %v683 = vcvt.s32.f32 %v651
      %v684 = vcvt.s32.f32 %v652
      %v685 = vcvt.s32.f32 %v653
      %v686 = vcvt.s32.f32 %v654
      %v687 = vcvt.s32.f32 %v655
      %v688 = vcvt.s32.f32 %v656
      %v689 = vcvt.s32.f32 %v657
      %v690 = vcvt.s32.f32 %v658
      %v691 = vcvt.s32.f32 %v659
      %v692 = vcvt.s32.f32 %v660
      %v693 = vcvt.s32.f32 %v661
      %v694 = vcvt.s32.f32 %v662
      %v695 = vcvt.s32.f32 %v663
      %v696 = vcvt.s32.f32 %v664
      %v697 = vcvt.s32.f32 %v665
      %v698 = vcvt.s32.f32 %v666
      %v699 = vcvt.s32.f32 %v667
      %v700 = vcvt.s32.f32 %v668
      %v701 = vcvt.s32.f32 %v669
      %v702 = vmul.f32 %v428, %v670
      %v703 = vmul.f32 %v430, %v671
      %v704 = vmul.f32 %v433, %v672
      %v705 = vmul.f32 %v435, %v673
      %v706 = vmul.f32 %v438, %v674
      %v707 = vmul.f32 %v440, %v675
      %v708 = vmul.f32 %v443, %v676
      %v709 = vmul.f32 %v445, %v677
      %v710 = vmul.f32 %v448, %v678
      %v711 = vmul.f32 %v450, %v679
      %v712 = vmul.f32 %v453, %v680
      %v713 = vmul.f32 %v455, %v681
      %v714 = vmul.f32 %v458, %v682
      %v715 = vmul.f32 %v460, %v683
      %v716 = vmul.f32 %v463, %v684
      %v717 = vmul.f32 %v465, %v685
      %v718 = vmul.f32 %v468, %v686
      %v719 = vmul.f32 %v470, %v687
      %v720 = vmul.f32 %v473, %v688
      %v721 = vmul.f32 %v475, %v689
      %v722 = vmul.f32 %v478, %v690
      %v723 = vmul.f32 %v480, %v691
      %v724 = vmul.f32 %v483, %v692
      %v725 = vmul.f32 %v485, %v693
      %v726 = vmul.f32 %v488, %v694
      %v727 = vmul.f32 %v490, %v695
      %v728 = vmul.f32 %v493, %v696
      %v729 = vmul.f32 %v495, %v697
      %v730 = vmul.f32 %v498, %v698
      %v731 = vmul.f32 %v500, %v699
      %v732 = vmul.f32 %v503, %v700
      %v733 = vmul.f32 %v505, %v701
      %v734 = vadd.f32 %v702, %v703
      %v735 = vadd.f32 %v734, %v704
      %v736 = vadd.f32 %v735, %v705
      %v737 = vadd.f32 %v736, %v706
      %v738 = vadd.f32 %v737, %v707
      %v739 = vadd.f32 %v738, %v708
      %v740 = vadd.f32 %v739, %v709
      %v741 = vadd.f32 %v740, %v710
      %v742 = vadd.f32 %v741, %v711
      %v743 = vadd.f32 %v742, %v712
      %v744 = vadd.f32 %v743, %v713
      %v745 = vadd.f32 %v744, %v714
      %v746 = vadd.f32 %v745, %v715
      %v747 = vadd.f32 %v746, %v716
      %v748 = vadd.f32 %v747, %v717
      %v749 = vadd.f32 %v748, %v718
      %v750 = vadd.f32 %v749, %v719
      %v751 = vadd.f32 %v750, %v720
      %v752 = vadd.f32 %v751, %v721
      %v753 = vadd.f32 %v752, %v722
      %v754 = vadd.f32 %v753, %v723
      %v755 = vadd.f32 %v754, %v724
      %v756 = vadd.f32 %v755, %v725
      %v757 = vadd.f32 %v756, %v726
      %v758 = vadd.f32 %v757, %v727
      %v759 = vadd.f32 %v758, %v728
      %v760 = vadd.f32 %v759, %v729
      %v761 = vadd.f32 %v760, %v730
      %v762 = vadd.f32 %v761, %v731
      %v763 = vadd.f32 %v762, %v732
      %v764 = vadd.f32 %v763, %v733
      %v765 = vrot.slane %v764, 4
      %v766 = vadd.f32 %v764, %v765
      %v767 = vrot.slane %v766, 2
      %v768 = vadd.f32 %v766, %v767
      %v769 = vrot.slane %v768, 1
      %v770 = vadd.f32 %v768, %v769
      %v771 = vmul.f32 %v702, %v428
      %v772 = vmul.f32 %v703, %v430
      %v773 = vmul.f32 %v704, %v433
      %v774 = vmul.f32 %v705, %v435
      %v775 = vmul.f32 %v706, %v438
      %v776 = vmul.f32 %v707, %v440
      %v777 = vmul.f32 %v708, %v443
      %v778 = vmul.f32 %v709, %v445
      %v779 = vmul.f32 %v710, %v448
      %v780 = vmul.f32 %v711, %v450
      %v781 = vmul.f32 %v712, %v453
      %v782 = vmul.f32 %v713, %v455
      %v783 = vmul.f32 %v714, %v458
      %v784 = vmul.f32 %v715, %v460
      %v785 = vmul.f32 %v716, %v463
      %v786 = vmul.f32 %v717, %v465
      %v787 = vmul.f32 %v718, %v468
      %v788 = vmul.f32 %v719, %v470
      %v789 = vmul.f32 %v720, %v473
      %v790 = vmul.f32 %v721, %v475
      %v791 = vmul.f32 %v722, %v478
      %v792 = vmul.f32 %v723, %v480
      %v793 = vmul.f32 %v724, %v483
      %v794 = vmul.f32 %v725, %v485
      %v795 = vmul.f32 %v726, %v488
      %v796 = vmul.f32 %v727, %v490
      %v797 = vmul.f32 %v728, %v493
      %v798 = vmul.f32 %v729, %v495
      %v799 = vmul.f32 %v730, %v498
      %v800 = vmul.f32 %v731, %v500
      %v801 = vmul.f32 %v732, %v503
      %v802 = vmul.f32 %v733, %v505
      %v803 = vadd.f32 %v771, %v772
      %v804 = vadd.f32 %v803, %v773
      %v805 = vadd.f32 %v804, %v774
      %v806 = vadd.f32 %v805, %v775
      %v807 = vadd.f32 %v806, %v776
      %v808 = vadd.f32 %v807, %v777
      %v809 = vadd.f32 %v808, %v778
      %v810 = vadd.f32 %v809, %v779
      %v811 = vadd.f32 %v810, %v780
      %v812 = vadd.f32 %v811, %v781
      %v813 = vadd.f32 %v812, %v782
      %v814 = vadd.f32 %v813, %v783
      %v815 = vadd.f32 %v814, %v784
      %v816 = vadd.f32 %v815, %v785
      %v817 = vadd.f32 %v816, %v786
      %v818 = vadd.f32 %v817, %v787
      %v819 = vadd.f32 %v818, %v788
      %v820 = vadd.f32 %v819, %v789
      %v821 = vadd.f32 %v820, %v790
      %v822 = vadd.f32 %v821, %v791
      %v823 = vadd.f32 %v822, %v792
      %v824 = vadd.f32 %v823, %v793
      %v825 = vadd.f32 %v824, %v794
      %v826 = vadd.f32 %v825, %v795
      %v827 = vadd.f32 %v826, %v796
      %v828 = vadd.f32 %v827, %v797
      %v829 = vadd.f32 %v828, %v798
      %v830 = vadd.f32 %v829, %v799
      %v831 = vadd.f32 %v830, %v800
      %v832 = vadd.f32 %v831, %v801
      %v833 = vadd.f32 %v832, %v802
      %v834 = vrot.slane %v833, 4
      %v835 = vadd.f32 %v833, %v834
      %v836 = vrot.slane %v835, 2
      %v837 = vadd.f32 %v835, %v836
      %v838 = vrot.slane %v837, 1
      %v839 = vadd.f32 %v837, %v838
      %vm840 = vcmask 1040384
      %v841 = vsel %vm840, %v770, %v839
      %vm842 = vcmask 1041408
      %v843 = vsel %vm842, %v841, 0.0
      %844 = vst [vmem:[%s211] sm:$0xff] %v843
      %s845 = smul.u32 32, %s16
      %p846 = scmp.lt.s32.totalorder %s845, 63
      %s847 = scalar_select %p846, %s845, 63
      %s848 = smul.addr %s847, 8
      %s849 = scalar_lea.vmem %s3, %s848
      %p850 = scmp.lt.s32.totalorder %s16, 1
      %s851 = scalar_select %p850, %s16, 1
      %s852 = smul.addr %s851, 8
      %s853 = scalar_lea.vmem %s4, %s852
      // Predicated region
      $region33: #{double_conv.6} parent=31 // pred_check
        %p854 = pneg %p102
      $region34: #{double_conv.6} parent=31 // pred_check_branch
        %856 = sbr.rel (%p854) target = $region36
      $region35: #{double_conv.6} parent=31 // pred_region
        %s857 = smul.u32 32, %s16
      $region36: #{double_conv.6} parent=31 // pred_fallthru
        _
      // Predicated region
      $region37: #{double_conv.6} parent=31 // pred_check
        %p858 = pneg %p128
      $region38: #{double_conv.6} parent=31 // pred_check_branch
        %860 = sbr.rel (%p858) target = $region40
      $region39: #{double_conv.6} parent=31 // pred_region
        _
      $region40: #{double_conv.6} parent=31 // pred_fallthru
        _
    $region32: #{double_conv.6} parent=5 // pred_fallthru
      _
    %p861 = scmp.le.s32.totalorder 2, %s11
    // Predicated region
    $region41: #{double_conv.6} parent=5 // pred_check
      %p862 = pneg %p861
    $region42: #{double_conv.6} parent=5 // pred_check_branch
      %864 = sbr.rel (%p862) target = $region44
    $region43: #{double_conv.6} parent=5 // pred_region
      %s865 = ssub.s32 %s11, 2
      // Predicated region
      $region45: #{double_conv.6} parent=43 // pred_check
        %p866 = pneg %p108
      $region46: #{double_conv.6} parent=43 // pred_check_branch
        %868 = sbr.rel (%p866) target = $region48
      $region47: #{double_conv.6} parent=43 // pred_region
        %s869 = smul.u32 32, %s17
        %p870 = scmp.lt.s32.totalorder %s869, 63
        %s871 = scalar_select %p870, %s869, 63
        %s872 = smul.addr %s871, 8
        %s873 = scalar_lea.vmem %s3, %s872
      $region48: #{double_conv.6} parent=43 // pred_fallthru
        _
      // Predicated region
      $region49: #{double_conv.6} parent=43 // pred_check
        %p874 = pneg %p134
      $region50: #{double_conv.6} parent=43 // pred_check_branch
        %876 = sbr.rel (%p874) target = $region52
      $region51: #{double_conv.6} parent=43 // pred_region
        %p877 = scmp.lt.s32.totalorder %s17, 1
        %s878 = scalar_select %p877, %s17, 1
        %s879 = smul.addr %s878, 8
        %s880 = scalar_lea.vmem %s4, %s879
      $region52: #{double_conv.6} parent=43 // pred_fallthru
        _
    $region44: #{double_conv.6} parent=5 // pred_fallthru
      _
  $region6: #{double_conv.6} parent=0 // loop_footer
    %s15 = sadd.s32 1, %s11
  $region7: #{double_conv.6} parent=0 // loop_footer_branch
    %10 = sbr.rel target = $region3
  $region8: #{double_conv.6} parent=0 // loop_exit
    _

</llo_original>
